<compile_context>
chip_gen: v5e
topology: v5e:2x2
jax: 0.10.0
libtpu: 0.0.40
codegen_flags: <defaults>
</compile_context>

<pallas_src>
import functools

import jax
import jax.numpy as jnp
from jax.experimental import pallas as pl
from jax.experimental.pallas import tpu as pltpu


# ---------------------------------------------------------------------------
# Tiling helpers
# ---------------------------------------------------------------------------

def _choose_tile(n, candidates):
    """Largest candidate that divides n; else the full dim (always legal)."""
    for c in candidates:
        if n >= c and n % c == 0:
            return c
    return n


def _even_parallel_tile(n, tile, min_tile=64):
    """Keep the 'parallel' axis count even and >= 2 (v7x megacore coverage)."""
    while (tile > min_tile and tile % 16 == 0
           and ((n // tile) < 2 or (n // tile) % 2 != 0)):
        tile //= 2
    return tile


def _vmem_budget():
    """(vmem_limit_bytes, physical capacity) sized per TPU generation."""
    cap = 64 * 1024 * 1024
    try:
        info = pltpu.get_tpu_info()
        cap = int(getattr(info, "vmem_capacity_bytes", cap))
    except Exception:
        pass
    return int(cap * 0.75), cap


def _fit_main_tiles(S, H, itemsize, budget, w_bufs):
    tile_s = _choose_tile(S, (512, 256, 128, 64, 32, 16, 8))
    tile_k = _choose_tile(H, (1024, 512, 256, 128))

    def working_set(ts, tk):
        # W K-slab (w_bufs deep) + x row-tile & out row-tile (double-buffered)
        # + f32 accumulator.
        return (w_bufs * H * tk * itemsize
                + 2 * 2 * ts * H * itemsize
                + ts * H * 4)

    while working_set(tile_s, tile_k) > budget:
        if tile_k >= 256 and tile_k % 256 == 0:
            tile_k //= 2
        elif tile_s >= 32 and tile_s % 16 == 0:
            tile_s //= 2
        else:
            break
    return tile_s, tile_k


def _fit_transpose_tiles(S, H, itemsize, budget):
    tile = _choose_tile(S, (256, 128, 64, 32, 16, 8))
    tile_k = _choose_tile(H, (1024, 512, 256, 128))

    def working_set(t, tk):
        # x K-slab (S, tk) + W tile (t, tk) double-buffered, residual + out
        # row-tiles double-buffered, f32 accumulator (t, S).
        return (2 * (S * tk + t * tk) * itemsize
                + 2 * 2 * t * S * itemsize
                + t * S * 4)

    while working_set(tile, tile_k) > budget:
        if tile_k >= 256 and tile_k % 256 == 0:
            tile_k //= 2
        elif tile >= 32 and tile % 16 == 0:
            tile //= 2
        else:
            break
    return tile, tile_k


# ---------------------------------------------------------------------------
# Kernels
# ---------------------------------------------------------------------------

def _layernorm_store(acc_ref, p_ref, o_ref, eps):
    """LayerNorm from the in-place f32 accumulator; gamma folded into rsqrt."""
    z = acc_ref[...]
    mean = jnp.mean(z, axis=-1, keepdims=True)
    cent = z - mean
    var = jnp.mean(cent * cent, axis=-1, keepdims=True)
    scale = jax.lax.rsqrt(var + eps) * p_ref[1:2, :]
    o_ref[...] = (cent * scale + p_ref[2:3, :]).astype(o_ref.dtype)


def _fused_rowtile_kernel(x_ref, w_ref, p_ref, o_ref, acc_ref, *,
                          eps, tile_k, k_align):
    """Main path (no transpose). grid = (S tiles [parallel], K tiles [arbitrary]).

    x_ref : (tile_s, H)  residual row-tile; its K-slice is also the MXU lhs.
    w_ref : (H, tile_k)  weight K-slab in native [out, in] layout.
    p_ref : (3, H)       packed bias / gamma / beta (f32).
    """
    k = pl.program_id(1)

    @pl.when(k == 0)
    def _():
        acc_ref[...] = jnp.zeros_like(acc_ref)

    k_start = k * tile_k
    if k_align > 1:
        k_start = pl.multiple_of(k_start, k_align)
    x_mm = x_ref[:, pl.ds(k_start, tile_k)]       # lane-aligned slice, no copy

    # trans_b matmul on native-dtype operands, f32 accumulation on the MXU.
    acc_ref[...] += jax.lax.dot_general(
        x_mm, w_ref[...],
        dimension_numbers=(((1,), (1,)), ((), ())),
        preferred_element_type=jnp.float32)

    @pl.when(k == pl.num_programs(1) - 1)
    def _():
        # dropout: eval mode => identity.
        # TODO(synk): training-mode dropout (pltpu.prng_random_bits mask) not wired in.
        acc_ref[...] += x_ref[...].astype(jnp.float32) + p_ref[0:1, :]
        _layernorm_store(acc_ref, p_ref, o_ref, eps)


def _fused_transposed_kernel(w_ref, xk_ref, xres_ref, bcol_ref, p_ref, o_ref,
                             acc_ref, *, eps):
    """Transpose branch (S == H): y^T row-tiles straight from the MXU.

    yt[o, s] = sum_k W[o, k] * x[s, k]  (trans_b dot_general; no XLU y.T).
    grid = (y^T row tiles [parallel], K tiles [arbitrary]).
    """
    k = pl.program_id(1)

    @pl.when(k == 0)
    def _():
        acc_ref[...] = jnp.zeros_like(acc_ref)

    acc_ref[...] += jax.lax.dot_general(
        w_ref[...], xk_ref[...],
        dimension_numbers=(((1,), (1,)), ((), ())),
        preferred_element_type=jnp.float32)

    @pl.when(k == pl.num_programs(1) - 1)
    def _():
        # dropout: eval mode => identity (see TODO above).
        acc_ref[...] += (xres_ref[...].astype(jnp.float32)
                         + bcol_ref[...].astype(jnp.float32))
        _layernorm_store(acc_ref, p_ref, o_ref, eps)


# ---------------------------------------------------------------------------
# Wrapper
# ---------------------------------------------------------------------------

def _main_path(x, w, params, eps, budget, vmem_limit, itemsize, big_vmem):
    S, H = x.shape

    # Pad awkward row counts to a 128 multiple (LN is row-wise; padded rows are
    # independent and sliced off afterwards). S <= 128 uses a full-dim tile.
    S_pad = S
    if S > 128 and S % 128 != 0:
        S_pad = ((S + 127) // 128) * 128
        x = jnp.pad(x, ((0, S_pad - S), (0, 0)))

    can_buffer3 = big_vmem and hasattr(pl, "Buffered")
    tile_s, tile_k = _fit_main_tiles(S_pad, H, itemsize, budget,
                                     3 if can_buffer3 else 2)
    tile_s = _even_parallel_tile(S_pad, tile_s)
    grid = (S_pad // tile_s, H // tile_k)

    k_align = 128 if tile_k % 128 == 0 else (8 if tile_k % 8 == 0 else 1)
    kernel = functools.partial(_fused_rowtile_kernel, eps=eps, tile_k=tile_k,
                               k_align=k_align)

    # v5e/v6e (128 MiB VMEM): triple-buffer the big weight-slab DMA when the K
    # axis is long enough to benefit. Not used on v7x (64 MiB, 3.2 TB/s HBM).
    w_spec_kwargs = {}
    if can_buffer3 and grid[1] >= 3:
        w_spec_kwargs["pipeline_mode"] = pl.Buffered(3)
    w_spec = pl.BlockSpec((H, tile_k), lambda i, k: (0, k), **w_spec_kwargs)

    out = pl.pallas_call(
        kernel,
        out_shape=jax.ShapeDtypeStruct((S_pad, H), x.dtype),
        grid_spec=pltpu.PrefetchScalarGridSpec(
            num_scalar_prefetch=0,
            grid=grid,
            in_specs=[
                pl.BlockSpec((tile_s, H), lambda i, k: (i, 0)),  # x (residual + lhs)
                w_spec,                                          # W [out,in] K-slab
                pl.BlockSpec((3, H), lambda i, k: (0, 0)),       # bias/gamma/beta
            ],
            out_specs=pl.BlockSpec((tile_s, H), lambda i, k: (i, 0)),
            scratch_shapes=[pltpu.VMEM((tile_s, H), jnp.float32)],
        ),
        compiler_params=pltpu.CompilerParams(
            dimension_semantics=("parallel", "arbitrary"),
            vmem_limit_bytes=vmem_limit),
    )(x, w, params)
    return out[:S] if S_pad != S else out


def _transposed_path(x, w, b, params, eps, budget, vmem_limit, itemsize):
    S, H = x.shape                                   # S == H here
    tile, tile_k = _fit_transpose_tiles(S, H, itemsize, budget)
    tile = _even_parallel_tile(S, tile)
    grid = (S // tile, H // tile_k)

    bcol = b.reshape(H, 1)
    kernel = functools.partial(_fused_transposed_kernel, eps=eps)

    return pl.pallas_call(
        kernel,
        out_shape=jax.ShapeDtypeStruct((S, H), x.dtype),
        grid_spec=pltpu.PrefetchScalarGridSpec(
            num_scalar_prefetch=0,
            grid=grid,
            in_specs=[
                pl.BlockSpec((tile, tile_k), lambda i, k: (i, k)),  # W row/K tile
                pl.BlockSpec((S, tile_k), lambda i, k: (0, k)),     # x K-slab (rhs)
                pl.BlockSpec((tile, H), lambda i, k: (i, 0)),       # x row tile (res)
                pl.BlockSpec((tile, 1), lambda i, k: (i, 0)),       # bias as column
                pl.BlockSpec((3, H), lambda i, k: (0, 0)),          # gamma/beta (packed)
            ],
            out_specs=pl.BlockSpec((tile, H), lambda i, k: (i, 0)),
            scratch_shapes=[pltpu.VMEM((tile, S), jnp.float32)],
        ),
        compiler_params=pltpu.CompilerParams(
            dimension_semantics=("parallel", "arbitrary"),
            vmem_limit_bytes=vmem_limit),
    )(w, x, x, bcol, params)


def added_normalized_attention(x, w, b, gamma, beta, *, eps=1e-5):
    """x: [S, H]; w: [H, H] (PyTorch Linear weight, [out, in]); b,gamma,beta: [H]."""
    S, H = x.shape
    assert w.shape == (H, H)

    vmem_limit, vmem_cap = _vmem_budget()
    budget = int(vmem_limit * 0.8)                 # headroom for params/internal scratch
    big_vmem = vmem_cap >= 100 * 1024 * 1024       # v5e / v6e (128 MiB); not v7x
    itemsize = jnp.dtype(x.dtype).itemsize

    # Packed lane-dense LayerNorm-side params: [bias; gamma; beta] (f32).
    params = jnp.stack([b, gamma, beta]).astype(jnp.float32)   # (3, H)

    if S == H:
        # PyTorch transpose branch fires iff the layer output dims are swapped
        # vs. the residual, i.e. square activations with Linear(H, H).
        return _transposed_path(x, w, b, params, eps, budget, vmem_limit, itemsize)

    return _main_path(x, w, params, eps, budget, vmem_limit, itemsize, big_vmem)


# ---------------------------------------------------------------------------
# Reference + demo
# ---------------------------------------------------------------------------

def _reference(x, w, b, gamma, beta, eps=1e-5):
    y = x @ w.T + b
    if x.shape[0] == y.shape[1] and x.shape[1] == y.shape[0]:
        y = y.T
    z = x + y
    mean = jnp.mean(z, axis=-1, keepdims=True)
    var = jnp.mean((z - mean) ** 2, axis=-1, keepdims=True)
    return (z - mean) / jnp.sqrt(var + eps) * gamma + beta


if __name__ == "__main__":
    key = jax.random.PRNGKey(0)
    H = 128  # hidden / LayerNorm dim (lane-aligned: multiple of 128)

    kx, kw, kb, kg, kbe = jax.random.split(key, 5)
    w = jax.random.normal(kw, (H, H), dtype=jnp.float32) * (1.0 / jnp.sqrt(H))
    b = jax.random.normal(kb, (H,), dtype=jnp.float32) * 0.01
    gamma = 1.0 + 0.1 * jax.random.normal(kg, (H,), dtype=jnp.float32)
    beta = 0.05 * jax.random.normal(kbe, (H,), dtype=jnp.float32)

    # Path 1: rectangular activations (no transpose), multi-tile S grid.
    S = 512
    x = jax.random.normal(kx, (S, H), dtype=jnp.float32)
    out = jax.block_until_ready(added_normalized_attention(x, w, b, gamma, beta))
    ref = _reference(x, w, b, gamma, beta)
    assert out.shape == (S, H)
    assert jnp.allclose(out, ref, atol=1e-3, rtol=1e-3), "mismatch (rect path)"

    # Path 2: square activations -> module's transpose branch fires.
    xs = jax.random.normal(jax.random.PRNGKey(1), (H, H), dtype=jnp.float32)
    out_t = jax.block_until_ready(added_normalized_attention(xs, w, b, gamma, beta))
    ref_t = _reference(xs, w, b, gamma, beta)
    assert out_t.shape == (H, H)
    assert jnp.allclose(out_t, ref_t, atol=1e-3, rtol=1e-3), "mismatch (transpose path)"

    print("KERNEL_OK")
</pallas_src>

<mosaic_0001>
module attributes {stable_mosaic.version = 11 : i64} {
  func.func @_fused_rowtile_kernel(%arg0: i32, %arg1: i32, %arg2: memref<256x128xf32, #tpu.memory_space<vmem>>, %arg3: memref<128x128xf32, #tpu.memory_space<vmem>>, %arg4: memref<3x128xf32, #tpu.memory_space<vmem>>, %arg5: memref<256x128xf32, #tpu.memory_space<vmem>>, %arg6: memref<256x128xf32, #tpu.memory_space<vmem>>) attributes {dimension_semantics = [#tpu.dimension_semantics<parallel>, #tpu.dimension_semantics<arbitrary>], iteration_bounds = array<i64: 2, 1>, scalar_prefetch = 0 : i64, scratch_operands = 1 : i64, tpu.core_type = #tpu.core_type<tc>, window_params = [{transform_indices = @transform_0, window_bounds = array<i64: 256, 128>}, {transform_indices = @transform_1, window_bounds = array<i64: 128, 128>}, {pipeline_mode = #tpu.pipeline_mode<synchronous>, transform_indices = @transform_2, window_bounds = array<i64: 3, 128>}, {transform_indices = @transform_3, window_bounds = array<i64: 256, 128>}]} {
    %c0_i32 = arith.constant 0 : i32
    %0 = arith.cmpi eq, %arg1, %c0_i32 : i32
    %1 = arith.extui %0 : i1 to i32
    %c0_i32_0 = arith.constant 0 : i32
    %2 = arith.cmpi ne, %1, %c0_i32_0 : i32
    scf.if %2 {
      %cst_9 = arith.constant 0.000000e+00 : f32
      %15 = vector.broadcast %cst_9 : f32 to vector<256x128xf32>
      %c0_10 = arith.constant 0 : index
      %c0_11 = arith.constant 0 : index
      %16 = vector.load %arg6[%c0_10, %c0_11] : memref<256x128xf32, #tpu.memory_space<vmem>>, vector<256x128xf32>
      tpu.vector_store %arg6[%c0_10, %c0_11], %15 {strides = array<i32>} : memref<256x128xf32, #tpu.memory_space<vmem>>, vector<256x128xf32>,
    } else {
    }
    %c128_i32 = arith.constant 128 : i32
    %3 = arith.muli %arg1, %c128_i32 : i32
    %4 = tpu.assume_multiple %3, 128 : i32
    %c0 = arith.constant 0 : index
    %5 = arith.index_cast %4 : i32 to index
    %6 = vector.load %arg2[%c0, %5] : memref<256x128xf32, #tpu.memory_space<vmem>>, vector<256x128xf32>
    %c0_1 = arith.constant 0 : index
    %c0_2 = arith.constant 0 : index
    %7 = vector.load %arg6[%c0_1, %c0_2] : memref<256x128xf32, #tpu.memory_space<vmem>>, vector<256x128xf32>
    %c0_3 = arith.constant 0 : index
    %c0_4 = arith.constant 0 : index
    %8 = vector.load %arg3[%c0_3, %c0_4] : memref<128x128xf32, #tpu.memory_space<vmem>>, vector<128x128xf32>
    %cst = arith.constant dense<0.000000e+00> : vector<256x128xf32>
    %9 = tpu.matmul %6, %8, %cst {dimension_numbers = #tpu.dot_dimension_numbers<[1], [1], [0], [0], [0, 0, 1, 0], [], []>} : vector<256x128xf32>, vector<128x128xf32>, vector<256x128xf32> -> vector<256x128xf32>
    %10 = arith.addf %7, %9 : vector<256x128xf32>
    %c0_5 = arith.constant 0 : index
    %c0_6 = arith.constant 0 : index
    %11 = vector.load %arg6[%c0_5, %c0_6] : memref<256x128xf32, #tpu.memory_space<vmem>>, vector<256x128xf32>
    tpu.vector_store %arg6[%c0_5, %c0_6], %10 {strides = array<i32>} : memref<256x128xf32, #tpu.memory_space<vmem>>, vector<256x128xf32>,
    %c0_i32_7 = arith.constant 0 : i32
    %12 = arith.cmpi eq, %arg1, %c0_i32_7 : i32
    %13 = arith.extui %12 : i1 to i32
    %c0_i32_8 = arith.constant 0 : i32
    %14 = arith.cmpi ne, %13, %c0_i32_8 : i32
    scf.if %14 {
      %c0_9 = arith.constant 0 : index
      %c0_10 = arith.constant 0 : index
      %15 = vector.load %arg6[%c0_9, %c0_10] : memref<256x128xf32, #tpu.memory_space<vmem>>, vector<256x128xf32>
      %c0_11 = arith.constant 0 : index
      %c0_12 = arith.constant 0 : index
      %16 = vector.load %arg2[%c0_11, %c0_12] : memref<256x128xf32, #tpu.memory_space<vmem>>, vector<256x128xf32>
      %c0_13 = arith.constant 0 : index
      %c0_14 = arith.constant 0 : index
      %17 = vector.load %arg4[%c0_13, %c0_14] : memref<3x128xf32, #tpu.memory_space<vmem>>, vector<1x128xf32>
      %18 = vector.broadcast %17 : vector<1x128xf32> to vector<256x128xf32>
      %19 = arith.addf %16, %18 : vector<256x128xf32>
      %20 = arith.addf %15, %19 : vector<256x128xf32>
      %c0_15 = arith.constant 0 : index
      %c0_16 = arith.constant 0 : index
      %21 = vector.load %arg6[%c0_15, %c0_16] : memref<256x128xf32, #tpu.memory_space<vmem>>, vector<256x128xf32>
      tpu.vector_store %arg6[%c0_15, %c0_16], %20 {strides = array<i32>} : memref<256x128xf32, #tpu.memory_space<vmem>>, vector<256x128xf32>,
      %c0_17 = arith.constant 0 : index
      %c0_18 = arith.constant 0 : index
      %22 = vector.load %arg6[%c0_17, %c0_18] : memref<256x128xf32, #tpu.memory_space<vmem>>, vector<256x128xf32>
      %cst_19 = arith.constant dense<0.000000e+00> : vector<256xf32>
      %23 = vector.multi_reduction <add>, %22, %cst_19 [1] : vector<256x128xf32> to vector<256xf32>
      %24 = vector.shape_cast %23 : vector<256xf32> to vector<256x1xf32>
      %cst_20 = arith.constant 1.280000e+02 : f32
      %25 = vector.broadcast %cst_20 : f32 to vector<256x1xf32>
      %26 = arith.divf %24, %25 : vector<256x1xf32>
      %27 = vector.broadcast %26 : vector<256x1xf32> to vector<256x128xf32>
      %28 = arith.subf %22, %27 : vector<256x128xf32>
      %29 = arith.mulf %28, %28 : vector<256x128xf32>
      %cst_21 = arith.constant dense<0.000000e+00> : vector<256xf32>
      %30 = vector.multi_reduction <add>, %29, %cst_21 [1] : vector<256x128xf32> to vector<256xf32>
      %31 = vector.shape_cast %30 : vector<256xf32> to vector<256x1xf32>
      %cst_22 = arith.constant 1.280000e+02 : f32
      %32 = vector.broadcast %cst_22 : f32 to vector<256x1xf32>
      %33 = arith.divf %31, %32 : vector<256x1xf32>
      %cst_23 = arith.constant 9.99999974E-6 : f32
      %34 = vector.broadcast %cst_23 : f32 to vector<256x1xf32>
      %35 = arith.addf %33, %34 : vector<256x1xf32>
      %36 = math.rsqrt %35 : vector<256x1xf32>
      %c1 = arith.constant 1 : index
      %c0_24 = arith.constant 0 : index
      %37 = vector.load %arg4[%c1, %c0_24] : memref<3x128xf32, #tpu.memory_space<vmem>>, vector<1x128xf32>
      %38 = vector.broadcast %36 : vector<256x1xf32> to vector<256x128xf32>
      %39 = vector.broadcast %37 : vector<1x128xf32> to vector<256x128xf32>
      %40 = arith.mulf %38, %39 : vector<256x128xf32>
      %41 = arith.mulf %28, %40 : vector<256x128xf32>
      %c2 = arith.constant 2 : index
      %c0_25 = arith.constant 0 : index
      %42 = vector.load %arg4[%c2, %c0_25] : memref<3x128xf32, #tpu.memory_space<vmem>>, vector<1x128xf32>
      %43 = vector.broadcast %42 : vector<1x128xf32> to vector<256x128xf32>
      %44 = arith.addf %41, %43 : vector<256x128xf32>
      %c0_26 = arith.constant 0 : index
      %c0_27 = arith.constant 0 : index
      %45 = vector.load %arg5[%c0_26, %c0_27] : memref<256x128xf32, #tpu.memory_space<vmem>>, vector<256x128xf32>
      tpu.vector_store %arg5[%c0_26, %c0_27], %44 {strides = array<i32>} : memref<256x128xf32, #tpu.memory_space<vmem>>, vector<256x128xf32>,
    } else {
    }
    return
  }
  func.func @transform_0(%arg0: i32, %arg1: i32) -> (i32, i32) {
    %c0_i32 = arith.constant 0 : i32
    %c0_i32_0 = arith.constant 0 : i32
    return %arg0, %c0_i32 : i32, i32
  }
  func.func @transform_1(%arg0: i32, %arg1: i32) -> (i32, i32) {
    %c0_i32 = arith.constant 0 : i32
    %c0_i32_0 = arith.constant 0 : i32
    return %c0_i32, %arg1 : i32, i32
  }
  func.func @transform_2(%arg0: i32, %arg1: i32) -> (i32, i32) {
    %c0_i32 = arith.constant 0 : i32
    %c0_i32_0 = arith.constant 0 : i32
    %c0_i32_1 = arith.constant 0 : i32
    return %c0_i32, %c0_i32_0 : i32, i32
  }
  func.func @transform_3(%arg0: i32, %arg1: i32) -> (i32, i32) {
    %c0_i32 = arith.constant 0 : i32
    %c0_i32_0 = arith.constant 0 : i32
    return %arg0, %c0_i32 : i32, i32
  }
}

</mosaic_0001>

<llo_original>
// kernel: tpu_custom_call.1
$region0: #{tpu_custom_call.1}
  #allocation0 [shape = 'u32[]', space=smem, size = 0x4, offset = 0x4, fixed_abs, tag = 'smem constant byte address 0x4 - core index']
  #allocation1 [shape = 'u32[72,128]{1,0:T(1,128)}', space=vmem, size = 0x9000, scoped, tag = 'internal scratch']
  #allocation2 [shape = 'f32[256,128]{1,0:T(8,128)}', space=vmem, size = 0x20000, scoped, tag = 'scratch operand']
  %s0 = inlined_call_operand.hbm [shape: f32[512,128], index: 0, kind: input, shape index: {}]
  %s1 = inlined_call_operand.hbm [shape: f32[128,128], index: 1, kind: input, shape index: {}]
  %s2 = inlined_call_operand.hbm [shape: f32[3,128], index: 2, kind: input, shape index: {}]
  %s3 = inlined_call_operand.hbm [shape: f32[512,128], index: 3, kind: output, shape index: {}]
  %s4 = sld [smem:[#allocation0]]
  $region65: #{tpu_custom_call.1} parent=0
    _
  %s6 = ssub.s32 1, %s4
  %s7 = scalar_select 0, %s6, %s4
  $region1: #{tpu_custom_call.1} parent=0
    #allocation3 [shape = 'u8[262144]{0}', space=vmem, size = 0x40000, scoped, tag = 'input window, operand 0']
    #allocation4 [shape = 's32[2]{0}', space=sflag, size = 0x8, scoped, tag = 'scoped memory for tpu_custom_call.1']
    #allocation5 [shape = 's32[2]{0}', space=sflag, size = 0x8, scoped, tag = 'scoped memory for tpu_custom_call.1']
    #allocation6 [shape = 'u8[65536]{0}', space=vmem, size = 0x10000, scoped, tag = 'input window, operand 1, single buffered']
    #allocation7 [shape = 's32[1]{0}', space=sflag, size = 0x4, scoped, tag = 'scoped memory for tpu_custom_call.1']
    #allocation8 [shape = 'u8[2048]{0}', space=vmem, size = 0x800, scoped, tag = 'input window, operand 2, single buffered']
    #allocation9 [shape = 'u8[262144]{0}', space=vmem, size = 0x40000, scoped, tag = 'output window, operand 0']
    %8 = vsyncpa [#allocation4], 0
    %s9 = scalar_lea.sflag [#allocation4], 1
    %10 = vsyncpa %s9, 0
    %11 = vsyncpa [#allocation7], 0
    %12 = vsyncpa [#allocation5], 0
    %s13 = scalar_lea.sflag [#allocation5], 1
    %14 = vsyncpa %s13, 0
    loop: start=0, step=1, limit=4
    $region2: #{tpu_custom_call.1} parent=1 // loop_pre_header
      _
    $region3: #{tpu_custom_call.1} parent=1 // loop_header
      %s16 = sphi 0, %s20
      %p17 = scmp.ge.s32.totalorder %s16, 4
      %s23 = sphi 0, %s35
      %s24 = sphi 0, %s31
      %s25 = sphi 0, %s23
      %s26 = sphi 0, %s24
      %s27 = sphi 0, %s25
      %s28 = sphi 0, %s26
      %s38 = sphi 0, %s40
      %s41 = sphi 0, %s38
      %s42 = sphi 0, %s41
      %s58 = sphi 0, %s42
      %s64 = sphi 0, %s66
      %s67 = sphi 0, %s64
      %s68 = sphi 0, %s67
      %s84 = sphi 0, %s68
      %s88 = sphi 0, %s88
      %s90 = sphi 0, %s88
      %s91 = sphi 0, %s90
      %s105 = sphi 0, %s91
      %s111 = sphi 0, %s113
      %s114 = sphi 0, %s111
      %s115 = sphi 0, %s114
      %s131 = sphi 0, %s115
    $region4: #{tpu_custom_call.1} parent=1 // loop_header_branch
      %19 = sbr.rel (%p17) target = $region8
    $region5: #{tpu_custom_call.1} parent=1 // loop_body
      %s21 = ssub.s32 %s16, 1
      %s22 = ssub.s32 %s16, 2
      %s29 = sadd.s32 1, %s24
      %p30 = scmp.ge.s32.totalorder %s29, 1
      %s31 = scalar_select %p30, 0, %s29
      %s32 = sadd.s32 1, %s23
      %s33 = scalar_select %p30, %s32, %s23
      %p34 = scmp.ge.s32.totalorder %s33, 2
      %s35 = scalar_select %p34, 0, %s33
      %s36 = ssub.s32 %s23, %s35
      %p37 = scmp.eq.s32.totalorder %s36, 0
      %s39 = sadd.s32 %s38, 1
      %s40 = scalar_select %p37, %s38, %s39
      %p43 = pneg %p37
      %p44 = scmp.eq.s32.totalorder %s16, 1
      %p45 = por %p43, %p44
      %p46 = scmp.ne.s32.totalorder %s38, %s41
      %p47 = scmp.eq.s32.totalorder %s16, 0
      %p48 = por %p46, %p47
      %p49 = scmp.ne.s32.totalorder %s38, %s41
      %p50 = scmp.eq.s32.totalorder %s21, 1
      %p51 = por %p49, %p50
      %p52 = scmp.ne.s32.totalorder %s41, %s42
      %p53 = scmp.eq.s32.totalorder %s21, 0
      %p54 = por %p52, %p53
      %p55 = scmp.ne.s32.totalorder %s41, %s42
      %p56 = scmp.eq.s32.totalorder %s22, 1
      %p57 = por %p55, %p56
      %p59 = scmp.ne.s32.totalorder %s42, %s58
      %p60 = scmp.eq.s32.totalorder %s22, 0
      %p61 = por %p59, %p60
      %s62 = ssub.s32 %s24, %s31
      %p63 = scmp.eq.s32.totalorder %s62, 0
      %s65 = sadd.s32 %s64, 1
      %s66 = scalar_select %p63, %s64, %s65
      %p69 = pneg %p63
      %p70 = scmp.eq.s32.totalorder %s16, 1
      %p71 = por %p69, %p70
      %p72 = scmp.ne.s32.totalorder %s64, %s67
      %p73 = scmp.eq.s32.totalorder %s16, 0
      %p74 = por %p72, %p73
      %p75 = scmp.ne.s32.totalorder %s64, %s67
      %p76 = scmp.eq.s32.totalorder %s21, 1
      %p77 = por %p75, %p76
      %p78 = scmp.ne.s32.totalorder %s67, %s68
      %p79 = scmp.eq.s32.totalorder %s21, 0
      %p80 = por %p78, %p79
      %p81 = scmp.ne.s32.totalorder %s67, %s68
      %p82 = scmp.eq.s32.totalorder %s22, 1
      %p83 = por %p81, %p82
      %p85 = scmp.ne.s32.totalorder %s68, %s84
      %p86 = scmp.eq.s32.totalorder %s22, 0
      %p87 = por %p85, %p86
      %s89 = sadd.s32 %s88, 1
      %p92 = scmp.eq.s32.totalorder %s16, 1
      %p93 = scmp.ne.s32.totalorder %s88, %s90
      %p94 = scmp.eq.s32.totalorder %s16, 0
      %p95 = por %p93, %p94
      %p96 = scmp.ne.s32.totalorder %s88, %s90
      %p97 = scmp.eq.s32.totalorder %s21, 1
      %p98 = por %p96, %p97
      %p99 = scmp.ne.s32.totalorder %s90, %s91
      %p100 = scmp.eq.s32.totalorder %s21, 0
      %p101 = por %p99, %p100
      %p102 = scmp.ne.s32.totalorder %s90, %s91
      %p103 = scmp.eq.s32.totalorder %s22, 1
      %p104 = por %p102, %p103
      %p106 = scmp.ne.s32.totalorder %s91, %s105
      %p107 = scmp.eq.s32.totalorder %s22, 0
      %p108 = por %p106, %p107
      %s109 = ssub.s32 %s23, %s35
      %p110 = scmp.eq.s32.totalorder %s109, 0
      %s112 = sadd.s32 %s111, 1
      %s113 = scalar_select %p110, %s111, %s112
      %p116 = pneg %p110
      %p117 = scmp.eq.s32.totalorder %s16, 1
      %p118 = por %p116, %p117
      %p119 = scmp.ne.s32.totalorder %s111, %s114
      %p120 = scmp.eq.s32.totalorder %s16, 0
      %p121 = por %p119, %p120
      %p122 = scmp.ne.s32.totalorder %s111, %s114
      %p123 = scmp.eq.s32.totalorder %s21, 1
      %p124 = por %p122, %p123
      %p125 = scmp.ne.s32.totalorder %s114, %s115
      %p126 = scmp.eq.s32.totalorder %s21, 0
      %p127 = por %p125, %p126
      %p128 = scmp.ne.s32.totalorder %s114, %s115
      %p129 = scmp.eq.s32.totalorder %s22, 1
      %p130 = por %p128, %p129
      %p132 = scmp.ne.s32.totalorder %s115, %s131
      %p133 = scmp.eq.s32.totalorder %s22, 0
      %p134 = por %p132, %p133
      %p135 = scmp.le.s32.totalorder 1, %s16
      %p136 = scmp.lt.s32.totalorder %s16, 3
      %p137 = pnand %p135, %p136
      %p138 = pneg %p137
      // Predicated region
      $region9: #{tpu_custom_call.1} parent=5 // pred_check
        _
      $region10: #{tpu_custom_call.1} parent=5 // pred_check_branch
        %140 = sbr.rel (%p137) target = $region12
      $region11: #{tpu_custom_call.1} parent=5 // pred_region
        %s141 = ssub.s32 %s16, 1
        // Predicated region
        $region13: #{tpu_custom_call.1} parent=11 // pred_check
          %p142 = pneg %p80
        $region14: #{tpu_custom_call.1} parent=11 // pred_check_branch
          %144 = sbr.rel (%p142) target = $region16
        $region15: #{tpu_custom_call.1} parent=11 // pred_region
          %146 = vsyncadd [#allocation7], 0
          %s147 = smul.addr %s26, 8
          %s148 = scalar_lea.hbm %s1, %s147
          %s149 = sshll.u32 %s148, 4
          %s150 = int_to_ptr.hbm [resolvable:$true] %s149
          %s151 = sshll.u32 [#allocation6], 4
          %s152 = int_to_ptr.vmem [resolvable:$true] %s151
          %157 = dma.hbm_to_vmem [thread:$0]  %s150, 2048, %s152, [#allocation7], 128, 128, 8
        $region16: #{tpu_custom_call.1} parent=11 // pred_fallthru
          _
        // Predicated region
        $region17: #{tpu_custom_call.1} parent=11 // pred_check
          %p158 = pneg %p101
        $region18: #{tpu_custom_call.1} parent=11 // pred_check_branch
          %160 = sbr.rel (%p158) target = $region20
        $region19: #{tpu_custom_call.1} parent=11 // pred_region
          %162 = vsyncadd [#allocation7], 0
          %s164 = sshll.u32 %s2, 4
          %s165 = int_to_ptr.hbm [resolvable:$true] %s164
          %s166 = sshll.u32 [#allocation8], 4
          %s167 = int_to_ptr.vmem [resolvable:$true] %s166
          %169 = dma.hbm_to_vmem [thread:$0]  %s165, 64, %s167, [#allocation7]
        $region20: #{tpu_custom_call.1} parent=11 // pred_fallthru
          _
      $region12: #{tpu_custom_call.1} parent=5 // pred_fallthru
        _
      %p170 = scmp.lt.s32.totalorder %s16, 2
      // Predicated region
      $region21: #{tpu_custom_call.1} parent=5 // pred_check
        %p171 = pneg %p170
      $region22: #{tpu_custom_call.1} parent=5 // pred_check_branch
        %173 = sbr.rel (%p171) target = $region24
      $region23: #{tpu_custom_call.1} parent=5 // pred_region
        // Predicated region
        $region25: #{tpu_custom_call.1} parent=23 // pred_check
          %p174 = pneg %p48
        $region26: #{tpu_custom_call.1} parent=23 // pred_check_branch
          %176 = sbr.rel (%p174) target = $region28
        $region27: #{tpu_custom_call.1} parent=23 // pred_region
          %s177 = sand.u32 %s38, 1
          %s178 = scalar_lea.sflag [#allocation4], %s177
          %s179 = sand.u32 %s38, 1
          %s180 = smul.addr %s179, 256
          %s181 = scalar_lea.vmem [#allocation3], %s180
          %s182 = smul.u32 32, %s23
          %184 = vsyncadd %s178, 0
          %s185 = smul.addr %s182, 8
          %s186 = scalar_lea.hbm %s0, %s185
          %s187 = sshll.u32 %s186, 4
          %s188 = int_to_ptr.hbm [resolvable:$true] %s187
          %s189 = sshll.u32 %s181, 4
          %s190 = int_to_ptr.vmem [resolvable:$true] %s189
          %195 = dma.hbm_to_vmem [thread:$0]  %s188, 4096, %s190, %s178, 128, 128, 8
        $region28: #{tpu_custom_call.1} parent=23 // pred_fallthru
          _
      $region24: #{tpu_custom_call.1} parent=5 // pred_fallthru
        _
      %p196 = scmp.le.s32.totalorder 1, %s16
      %p197 = scmp.lt.s32.totalorder %s16, 3
      %p198 = pnand %p196, %p197
      %p199 = pneg %p198
      // Predicated region
      $region29: #{tpu_custom_call.1} parent=5 // pred_check
        _
      $region30: #{tpu_custom_call.1} parent=5 // pred_check_branch
        %201 = sbr.rel (%p198) target = $region32
      $region31: #{tpu_custom_call.1} parent=5 // pred_region
        %s202 = ssub.s32 %s16, 1
        %s203 = sand.u32 %s41, 1
        %s204 = scalar_lea.sflag [#allocation4], %s203
        %s205 = sand.u32 %s41, 1
        %s206 = smul.addr %s205, 256
        %s207 = scalar_lea.vmem [#allocation3], %s206
        // Predicated region
        $region33: #{tpu_custom_call.1} parent=31 // pred_check
          %p208 = pneg %p54
        $region34: #{tpu_custom_call.1} parent=31 // pred_check_branch
          %210 = sbr.rel (%p208) target = $region36
        $region35: #{tpu_custom_call.1} parent=31 // pred_region
          %212 = dma.done %s204, 4096
        $region36: #{tpu_custom_call.1} parent=31 // pred_fallthru
          _
        // Predicated region
        $region37: #{tpu_custom_call.1} parent=31 // pred_check
          %p213 = pneg %p80
        $region38: #{tpu_custom_call.1} parent=31 // pred_check_branch
          %215 = sbr.rel (%p213) target = $region40
        $region39: #{tpu_custom_call.1} parent=31 // pred_region
          %217 = dma.done [#allocation7], 2048
        $region40: #{tpu_custom_call.1} parent=31 // pred_fallthru
          _
        // Predicated region
        $region41: #{tpu_custom_call.1} parent=31 // pred_check
          %p218 = pneg %p101
        $region42: #{tpu_custom_call.1} parent=31 // pred_check_branch
          %220 = sbr.rel (%p218) target = $region44
        $region43: #{tpu_custom_call.1} parent=31 // pred_region
          %222 = dma.done [#allocation7], 64
        $region44: #{tpu_custom_call.1} parent=31 // pred_fallthru
          _
        %s223 = sand.u32 %s41, 1
        %s224 = scalar_lea.sflag [#allocation4], %s223
        %s225 = sand.u32 %s41, 1
        %s226 = smul.addr %s225, 256
        %s227 = scalar_lea.vmem [#allocation3], %s226
        %p228 = pneg %p54
        %p229 = pneg %p51
        %p230 = pneg %p80
        %p231 = pneg %p77
        %p232 = pneg %p101
        %p233 = pneg %p98
        %p234 = pneg %p127
        %p235 = pneg %p124
        %s236 = sand.u32 %s114, 1
        %s237 = scalar_lea.sflag [#allocation5], %s236
        %s238 = sand.u32 %s114, 1
        %s239 = smul.addr %s238, 256
        %s240 = scalar_lea.vmem [#allocation9], %s239
        %s241 = smul.u32 32, %s25
        %s242 = smul.u32 32, %s25
        %p243 = scmp.eq.s32.totalorder %s26, 0
        // Predicated region
        $region45: #{tpu_custom_call.1} parent=31 // pred_check
          %p244 = pneg %p243
        $region46: #{tpu_custom_call.1} parent=31 // pred_check_branch
          %246 = sbr.rel (%p244) target = $region48
        $region47: #{tpu_custom_call.1} parent=31 // pred_region
          %247 = vst [vmem:[#allocation2] sm:$0xff] 0.0
          %248 = vst [vmem:[#allocation2 + $0x8] sm:$0xff] 0.0
          %249 = vst [vmem:[#allocation2 + $0x10] sm:$0xff] 0.0
          %250 = vst [vmem:[#allocation2 + $0x18] sm:$0xff] 0.0
          %251 = vst [vmem:[#allocation2 + $0x20] sm:$0xff] 0.0
          %252 = vst [vmem:[#allocation2 + $0x28] sm:$0xff] 0.0
          %253 = vst [vmem:[#allocation2 + $0x30] sm:$0xff] 0.0
          %254 = vst [vmem:[#allocation2 + $0x38] sm:$0xff] 0.0
          %255 = vst [vmem:[#allocation2 + $0x40] sm:$0xff] 0.0
          %256 = vst [vmem:[#allocation2 + $0x48] sm:$0xff] 0.0
          %257 = vst [vmem:[#allocation2 + $0x50] sm:$0xff] 0.0
          %258 = vst [vmem:[#allocation2 + $0x58] sm:$0xff] 0.0
          %259 = vst [vmem:[#allocation2 + $0x60] sm:$0xff] 0.0
          %260 = vst [vmem:[#allocation2 + $0x68] sm:$0xff] 0.0
          %261 = vst [vmem:[#allocation2 + $0x70] sm:$0xff] 0.0
          %262 = vst [vmem:[#allocation2 + $0x78] sm:$0xff] 0.0
          %263 = vst [vmem:[#allocation2 + $0x80] sm:$0xff] 0.0
          %264 = vst [vmem:[#allocation2 + $0x88] sm:$0xff] 0.0
          %265 = vst [vmem:[#allocation2 + $0x90] sm:$0xff] 0.0
          %266 = vst [vmem:[#allocation2 + $0x98] sm:$0xff] 0.0
          %267 = vst [vmem:[#allocation2 + $0xa0] sm:$0xff] 0.0
          %268 = vst [vmem:[#allocation2 + $0xa8] sm:$0xff] 0.0
          %269 = vst [vmem:[#allocation2 + $0xb0] sm:$0xff] 0.0
          %270 = vst [vmem:[#allocation2 + $0xb8] sm:$0xff] 0.0
          %271 = vst [vmem:[#allocation2 + $0xc0] sm:$0xff] 0.0
          %272 = vst [vmem:[#allocation2 + $0xc8] sm:$0xff] 0.0
          %273 = vst [vmem:[#allocation2 + $0xd0] sm:$0xff] 0.0
          %274 = vst [vmem:[#allocation2 + $0xd8] sm:$0xff] 0.0
          %275 = vst [vmem:[#allocation2 + $0xe0] sm:$0xff] 0.0
          %276 = vst [vmem:[#allocation2 + $0xe8] sm:$0xff] 0.0
          %277 = vst [vmem:[#allocation2 + $0xf0] sm:$0xff] 0.0
          %278 = vst [vmem:[#allocation2 + $0xf8] sm:$0xff] 0.0
        $region48: #{tpu_custom_call.1} parent=31 // pred_fallthru
          _
        %s279 = smul.u32 %s26, 128
        %s280 = sshra.s32 %s279, 7
        %s281 = sand.u32 %s279, 127
        %s282 = scalar_lea.vmem %s207, %s280 [#allocation3]
        %v283 = vld [vmem:[%s282] sm:$0xff]
        %v284 = vld [vmem:[%s282 + $0x8] sm:$0xff]
        %v285 = vld [vmem:[%s282 + $0x10] sm:$0xff]
        %v286 = vld [vmem:[%s282 + $0x18] sm:$0xff]
        %v287 = vld [vmem:[%s282 + $0x20] sm:$0xff]
        %v288 = vld [vmem:[%s282 + $0x28] sm:$0xff]
        %v289 = vld [vmem:[%s282 + $0x30] sm:$0xff]
        %v290 = vld [vmem:[%s282 + $0x38] sm:$0xff]
        %v291 = vld [vmem:[%s282 + $0x40] sm:$0xff]
        %v292 = vld [vmem:[%s282 + $0x48] sm:$0xff]
        %v293 = vld [vmem:[%s282 + $0x50] sm:$0xff]
        %v294 = vld [vmem:[%s282 + $0x58] sm:$0xff]
        %v295 = vld [vmem:[%s282 + $0x60] sm:$0xff]
        %v296 = vld [vmem:[%s282 + $0x68] sm:$0xff]
        %v297 = vld [vmem:[%s282 + $0x70] sm:$0xff]
        %v298 = vld [vmem:[%s282 + $0x78] sm:$0xff]
        %v299 = vld [vmem:[%s282 + $0x80] sm:$0xff]
        %v300 = vld [vmem:[%s282 + $0x88] sm:$0xff]
        %v301 = vld [vmem:[%s282 + $0x90] sm:$0xff]
        %v302 = vld [vmem:[%s282 + $0x98] sm:$0xff]
        %v303 = vld [vmem:[%s282 + $0xa0] sm:$0xff]
        %v304 = vld [vmem:[%s282 + $0xa8] sm:$0xff]
        %v305 = vld [vmem:[%s282 + $0xb0] sm:$0xff]
        %v306 = vld [vmem:[%s282 + $0xb8] sm:$0xff]
        %v307 = vld [vmem:[%s282 + $0xc0] sm:$0xff]
        %v308 = vld [vmem:[%s282 + $0xc8] sm:$0xff]
        %v309 = vld [vmem:[%s282 + $0xd0] sm:$0xff]
        %v310 = vld [vmem:[%s282 + $0xd8] sm:$0xff]
        %v311 = vld [vmem:[%s282 + $0xe0] sm:$0xff]
        %v312 = vld [vmem:[%s282 + $0xe8] sm:$0xff]
        %v313 = vld [vmem:[%s282 + $0xf0] sm:$0xff]
        %v314 = vld [vmem:[%s282 + $0xf8] sm:$0xff]
        %v315 = vld [vmem:[#allocation2] sm:$0xff]
        %v316 = vld [vmem:[#allocation2 + $0x8] sm:$0xff]
        %v317 = vld [vmem:[#allocation2 + $0x10] sm:$0xff]
        %v318 = vld [vmem:[#allocation2 + $0x18] sm:$0xff]
        %v319 = vld [vmem:[#allocation2 + $0x20] sm:$0xff]
        %v320 = vld [vmem:[#allocation2 + $0x28] sm:$0xff]
        %v321 = vld [vmem:[#allocation2 + $0x30] sm:$0xff]
        %v322 = vld [vmem:[#allocation2 + $0x38] sm:$0xff]
        %v323 = vld [vmem:[#allocation2 + $0x40] sm:$0xff]
        %v324 = vld [vmem:[#allocation2 + $0x48] sm:$0xff]
        %v325 = vld [vmem:[#allocation2 + $0x50] sm:$0xff]
        %v326 = vld [vmem:[#allocation2 + $0x58] sm:$0xff]
        %v327 = vld [vmem:[#allocation2 + $0x60] sm:$0xff]
        %v328 = vld [vmem:[#allocation2 + $0x68] sm:$0xff]
        %v329 = vld [vmem:[#allocation2 + $0x70] sm:$0xff]
        %v330 = vld [vmem:[#allocation2 + $0x78] sm:$0xff]
        %v331 = vld [vmem:[#allocation2 + $0x80] sm:$0xff]
        %v332 = vld [vmem:[#allocation2 + $0x88] sm:$0xff]
        %v333 = vld [vmem:[#allocation2 + $0x90] sm:$0xff]
        %v334 = vld [vmem:[#allocation2 + $0x98] sm:$0xff]
        %v335 = vld [vmem:[#allocation2 + $0xa0] sm:$0xff]
        %v336 = vld [vmem:[#allocation2 + $0xa8] sm:$0xff]
        %v337 = vld [vmem:[#allocation2 + $0xb0] sm:$0xff]
        %v338 = vld [vmem:[#allocation2 + $0xb8] sm:$0xff]
        %v339 = vld [vmem:[#allocation2 + $0xc0] sm:$0xff]
        %v340 = vld [vmem:[#allocation2 + $0xc8] sm:$0xff]
        %v341 = vld [vmem:[#allocation2 + $0xd0] sm:$0xff]
        %v342 = vld [vmem:[#allocation2 + $0xd8] sm:$0xff]
        %v343 = vld [vmem:[#allocation2 + $0xe0] sm:$0xff]
        %v344 = vld [vmem:[#allocation2 + $0xe8] sm:$0xff]
        %v345 = vld [vmem:[#allocation2 + $0xf0] sm:$0xff]
        %v346 = vld [vmem:[#allocation2 + $0xf8] sm:$0xff]
        %v347 = vld [vmem:[#allocation6] sm:$0xff]
        %v348 = vld [vmem:[#allocation6 + $0x8] sm:$0xff]
        %v349 = vld [vmem:[#allocation6 + $0x10] sm:$0xff]
        %v350 = vld [vmem:[#allocation6 + $0x18] sm:$0xff]
        %v351 = vld [vmem:[#allocation6 + $0x20] sm:$0xff]
        %v352 = vld [vmem:[#allocation6 + $0x28] sm:$0xff]
        %v353 = vld [vmem:[#allocation6 + $0x30] sm:$0xff]
        %v354 = vld [vmem:[#allocation6 + $0x38] sm:$0xff]
        %v355 = vld [vmem:[#allocation6 + $0x40] sm:$0xff]
        %v356 = vld [vmem:[#allocation6 + $0x48] sm:$0xff]
        %v357 = vld [vmem:[#allocation6 + $0x50] sm:$0xff]
        %v358 = vld [vmem:[#allocation6 + $0x58] sm:$0xff]
        %v359 = vld [vmem:[#allocation6 + $0x60] sm:$0xff]
        %v360 = vld [vmem:[#allocation6 + $0x68] sm:$0xff]
        %v361 = vld [vmem:[#allocation6 + $0x70] sm:$0xff]
        %v362 = vld [vmem:[#allocation6 + $0x78] sm:$0xff]
        %363 = vmatpush.xpose.msra.mxu0 %v362
        %364 = vmatpush.xpose.msra.mxu0 %v361
        %365 = vmatpush.xpose.msra.mxu0 %v360
        %366 = vmatpush.xpose.msra.mxu0 %v359
        %367 = vmatpush.xpose.msra.mxu0 %v358
        %368 = vmatpush.xpose.msra.mxu0 %v357
        %369 = vmatpush.xpose.msra.mxu0 %v356
        %370 = vmatpush.xpose.msra.mxu0 %v355
        %371 = vmatpush.xpose.msra.mxu0 %v354
        %372 = vmatpush.xpose.msra.mxu0 %v353
        %373 = vmatpush.xpose.msra.mxu0 %v352
        %374 = vmatpush.xpose.msra.mxu0 %v351
        %375 = vmatpush.xpose.msra.mxu0 %v350
        %376 = vmatpush.xpose.msra.mxu0 %v349
        %377 = vmatpush.xpose.msra.mxu0 %v348
        %378 = vmatpush.xpose.msra.mxu0 %v347
        %379 = vmatmul.f32.gmra.mxu0 %v283
        %v380 = vpop.f32.mrf.mxu0
        %v381 = vadd.f32 0.0, %v380
        %382 = vmatmul.f32.gmra.mxu0 %v284
        %v383 = vpop.f32.mrf.mxu0
        %v384 = vadd.f32 0.0, %v383
        %385 = vmatmul.f32.gmra.mxu0 %v285
        %v386 = vpop.f32.mrf.mxu0
        %v387 = vadd.f32 0.0, %v386
        %388 = vmatmul.f32.gmra.mxu0 %v286
        %v389 = vpop.f32.mrf.mxu0
        %v390 = vadd.f32 0.0, %v389
        %391 = vmatmul.f32.gmra.mxu0 %v287
        %v392 = vpop.f32.mrf.mxu0
        %v393 = vadd.f32 0.0, %v392
        %394 = vmatmul.f32.gmra.mxu0 %v288
        %v395 = vpop.f32.mrf.mxu0
        %v396 = vadd.f32 0.0, %v395
        %397 = vmatmul.f32.gmra.mxu0 %v289
        %v398 = vpop.f32.mrf.mxu0
        %v399 = vadd.f32 0.0, %v398
        %400 = vmatmul.f32.gmra.mxu0 %v290
        %v401 = vpop.f32.mrf.mxu0
        %v402 = vadd.f32 0.0, %v401
        %403 = vmatmul.f32.gmra.mxu0 %v291
        %v404 = vpop.f32.mrf.mxu0
        %v405 = vadd.f32 0.0, %v404
        %406 = vmatmul.f32.gmra.mxu0 %v292
        %v407 = vpop.f32.mrf.mxu0
        %v408 = vadd.f32 0.0, %v407
        %409 = vmatmul.f32.gmra.mxu0 %v293
        %v410 = vpop.f32.mrf.mxu0
        %v411 = vadd.f32 0.0, %v410
        %412 = vmatmul.f32.gmra.mxu0 %v294
        %v413 = vpop.f32.mrf.mxu0
        %v414 = vadd.f32 0.0, %v413
        %415 = vmatmul.f32.gmra.mxu0 %v295
        %v416 = vpop.f32.mrf.mxu0
        %v417 = vadd.f32 0.0, %v416
        %418 = vmatmul.f32.gmra.mxu0 %v296
        %v419 = vpop.f32.mrf.mxu0
        %v420 = vadd.f32 0.0, %v419
        %421 = vmatmul.f32.gmra.mxu0 %v297
        %v422 = vpop.f32.mrf.mxu0
        %v423 = vadd.f32 0.0, %v422
        %424 = vmatmul.f32.gmra.mxu0 %v298
        %v425 = vpop.f32.mrf.mxu0
        %v426 = vadd.f32 0.0, %v425
        %427 = vmatmul.f32.gmra.mxu0 %v299
        %v428 = vpop.f32.mrf.mxu0
        %v429 = vadd.f32 0.0, %v428
        %430 = vmatmul.f32.gmra.mxu0 %v300
        %v431 = vpop.f32.mrf.mxu0
        %v432 = vadd.f32 0.0, %v431
        %433 = vmatmul.f32.gmra.mxu0 %v301
        %v434 = vpop.f32.mrf.mxu0
        %v435 = vadd.f32 0.0, %v434
        %436 = vmatmul.f32.gmra.mxu0 %v302
        %v437 = vpop.f32.mrf.mxu0
        %v438 = vadd.f32 0.0, %v437
        %439 = vmatmul.f32.gmra.mxu0 %v303
        %v440 = vpop.f32.mrf.mxu0
        %v441 = vadd.f32 0.0, %v440
        %442 = vmatmul.f32.gmra.mxu0 %v304
        %v443 = vpop.f32.mrf.mxu0
        %v444 = vadd.f32 0.0, %v443
        %445 = vmatmul.f32.gmra.mxu0 %v305
        %v446 = vpop.f32.mrf.mxu0
        %v447 = vadd.f32 0.0, %v446
        %448 = vmatmul.f32.gmra.mxu0 %v306
        %v449 = vpop.f32.mrf.mxu0
        %v450 = vadd.f32 0.0, %v449
        %451 = vmatmul.f32.gmra.mxu0 %v307
        %v452 = vpop.f32.mrf.mxu0
        %v453 = vadd.f32 0.0, %v452
        %454 = vmatmul.f32.gmra.mxu0 %v308
        %v455 = vpop.f32.mrf.mxu0
        %v456 = vadd.f32 0.0, %v455
        %457 = vmatmul.f32.gmra.mxu0 %v309
        %v458 = vpop.f32.mrf.mxu0
        %v459 = vadd.f32 0.0, %v458
        %460 = vmatmul.f32.gmra.mxu0 %v310
        %v461 = vpop.f32.mrf.mxu0
        %v462 = vadd.f32 0.0, %v461
        %463 = vmatmul.f32.gmra.mxu0 %v311
        %v464 = vpop.f32.mrf.mxu0
        %v465 = vadd.f32 0.0, %v464
        %466 = vmatmul.f32.gmra.mxu0 %v312
        %v467 = vpop.f32.mrf.mxu0
        %v468 = vadd.f32 0.0, %v467
        %469 = vmatmul.f32.gmra.mxu0 %v313
        %v470 = vpop.f32.mrf.mxu0
        %v471 = vadd.f32 0.0, %v470
        %472 = vmatmul.f32.gmra.mxu0 %v314
        %v473 = vpop.f32.mrf.mxu0
        %v474 = vadd.f32 0.0, %v473
        %475 = vdwg.mxu0
        %v476 = vadd.f32 %v315, %v381
        %v477 = vadd.f32 %v316, %v384
        %v478 = vadd.f32 %v317, %v387
        %v479 = vadd.f32 %v318, %v390
        %v480 = vadd.f32 %v319, %v393
        %v481 = vadd.f32 %v320, %v396
        %v482 = vadd.f32 %v321, %v399
        %v483 = vadd.f32 %v322, %v402
        %v484 = vadd.f32 %v323, %v405
        %v485 = vadd.f32 %v324, %v408
        %v486 = vadd.f32 %v325, %v411
        %v487 = vadd.f32 %v326, %v414
        %v488 = vadd.f32 %v327, %v417
        %v489 = vadd.f32 %v328, %v420
        %v490 = vadd.f32 %v329, %v423
        %v491 = vadd.f32 %v330, %v426
        %v492 = vadd.f32 %v331, %v429
        %v493 = vadd.f32 %v332, %v432
        %v494 = vadd.f32 %v333, %v435
        %v495 = vadd.f32 %v334, %v438
        %v496 = vadd.f32 %v335, %v441
        %v497 = vadd.f32 %v336, %v444
        %v498 = vadd.f32 %v337, %v447
        %v499 = vadd.f32 %v338, %v450
        %v500 = vadd.f32 %v339, %v453
        %v501 = vadd.f32 %v340, %v456
        %v502 = vadd.f32 %v341, %v459
        %v503 = vadd.f32 %v342, %v462
        %v504 = vadd.f32 %v343, %v465
        %v505 = vadd.f32 %v344, %v468
        %v506 = vadd.f32 %v345, %v471
        %v507 = vadd.f32 %v346, %v474
        %508 = vst [vmem:[#allocation2] sm:$0xff] %v476
        %509 = vst [vmem:[#allocation2 + $0x8] sm:$0xff] %v477
        %510 = vst [vmem:[#allocation2 + $0x10] sm:$0xff] %v478
        %511 = vst [vmem:[#allocation2 + $0x18] sm:$0xff] %v479
        %512 = vst [vmem:[#allocation2 + $0x20] sm:$0xff] %v480
        %513 = vst [vmem:[#allocation2 + $0x28] sm:$0xff] %v481
        %514 = vst [vmem:[#allocation2 + $0x30] sm:$0xff] %v482
        %515 = vst [vmem:[#allocation2 + $0x38] sm:$0xff] %v483
        %516 = vst [vmem:[#allocation2 + $0x40] sm:$0xff] %v484
        %517 = vst [vmem:[#allocation2 + $0x48] sm:$0xff] %v485
        %518 = vst [vmem:[#allocation2 + $0x50] sm:$0xff] %v486
        %519 = vst [vmem:[#allocation2 + $0x58] sm:$0xff] %v487
        %520 = vst [vmem:[#allocation2 + $0x60] sm:$0xff] %v488
        %521 = vst [vmem:[#allocation2 + $0x68] sm:$0xff] %v489
        %522 = vst [vmem:[#allocation2 + $0x70] sm:$0xff] %v490
        %523 = vst [vmem:[#allocation2 + $0x78] sm:$0xff] %v491
        %524 = vst [vmem:[#allocation2 + $0x80] sm:$0xff] %v492
        %525 = vst [vmem:[#allocation2 + $0x88] sm:$0xff] %v493
        %526 = vst [vmem:[#allocation2 + $0x90] sm:$0xff] %v494
        %527 = vst [vmem:[#allocation2 + $0x98] sm:$0xff] %v495
        %528 = vst [vmem:[#allocation2 + $0xa0] sm:$0xff] %v496
        %529 = vst [vmem:[#allocation2 + $0xa8] sm:$0xff] %v497
        %530 = vst [vmem:[#allocation2 + $0xb0] sm:$0xff] %v498
        %531 = vst [vmem:[#allocation2 + $0xb8] sm:$0xff] %v499
        %532 = vst [vmem:[#allocation2 + $0xc0] sm:$0xff] %v500
        %533 = vst [vmem:[#allocation2 + $0xc8] sm:$0xff] %v501
        %534 = vst [vmem:[#allocation2 + $0xd0] sm:$0xff] %v502
        %535 = vst [vmem:[#allocation2 + $0xd8] sm:$0xff] %v503
        %536 = vst [vmem:[#allocation2 + $0xe0] sm:$0xff] %v504
        %537 = vst [vmem:[#allocation2 + $0xe8] sm:$0xff] %v505
        %538 = vst [vmem:[#allocation2 + $0xf0] sm:$0xff] %v506
        %539 = vst [vmem:[#allocation2 + $0xf8] sm:$0xff] %v507
        // Predicated region
        $region49: #{tpu_custom_call.1} parent=31 // pred_check
          %p540 = pneg %p243
        $region50: #{tpu_custom_call.1} parent=31 // pred_check_branch
          %542 = sbr.rel (%p540) target = $region52
        $region51: #{tpu_custom_call.1} parent=31 // pred_region
          %v543 = vld [vmem:[#allocation2] sm:$0xff]
          %v544 = vld [vmem:[#allocation2 + $0x8] sm:$0xff]
          %v545 = vld [vmem:[#allocation2 + $0x10] sm:$0xff]
          %v546 = vld [vmem:[#allocation2 + $0x18] sm:$0xff]
          %v547 = vld [vmem:[#allocation2 + $0x20] sm:$0xff]
          %v548 = vld [vmem:[#allocation2 + $0x28] sm:$0xff]
          %v549 = vld [vmem:[#allocation2 + $0x30] sm:$0xff]
          %v550 = vld [vmem:[#allocation2 + $0x38] sm:$0xff]
          %v551 = vld [vmem:[#allocation2 + $0x40] sm:$0xff]
          %v552 = vld [vmem:[#allocation2 + $0x48] sm:$0xff]
          %v553 = vld [vmem:[#allocation2 + $0x50] sm:$0xff]
          %v554 = vld [vmem:[#allocation2 + $0x58] sm:$0xff]
          %v555 = vld [vmem:[#allocation2 + $0x60] sm:$0xff]
          %v556 = vld [vmem:[#allocation2 + $0x68] sm:$0xff]
          %v557 = vld [vmem:[#allocation2 + $0x70] sm:$0xff]
          %v558 = vld [vmem:[#allocation2 + $0x78] sm:$0xff]
          %v559 = vld [vmem:[#allocation2 + $0x80] sm:$0xff]
          %v560 = vld [vmem:[#allocation2 + $0x88] sm:$0xff]
          %v561 = vld [vmem:[#allocation2 + $0x90] sm:$0xff]
          %v562 = vld [vmem:[#allocation2 + $0x98] sm:$0xff]
          %v563 = vld [vmem:[#allocation2 + $0xa0] sm:$0xff]
          %v564 = vld [vmem:[#allocation2 + $0xa8] sm:$0xff]
          %v565 = vld [vmem:[#allocation2 + $0xb0] sm:$0xff]
          %v566 = vld [vmem:[#allocation2 + $0xb8] sm:$0xff]
          %v567 = vld [vmem:[#allocation2 + $0xc0] sm:$0xff]
          %v568 = vld [vmem:[#allocation2 + $0xc8] sm:$0xff]
          %v569 = vld [vmem:[#allocation2 + $0xd0] sm:$0xff]
          %v570 = vld [vmem:[#allocation2 + $0xd8] sm:$0xff]
          %v571 = vld [vmem:[#allocation2 + $0xe0] sm:$0xff]
          %v572 = vld [vmem:[#allocation2 + $0xe8] sm:$0xff]
          %v573 = vld [vmem:[#allocation2 + $0xf0] sm:$0xff]
          %v574 = vld [vmem:[#allocation2 + $0xf8] sm:$0xff]
          %v575 = vld [vmem:[%s207] sm:$0xff]
          %v576 = vld [vmem:[%s207 + $0x8] sm:$0xff]
          %v577 = vld [vmem:[%s207 + $0x10] sm:$0xff]
          %v578 = vld [vmem:[%s207 + $0x18] sm:$0xff]
          %v579 = vld [vmem:[%s207 + $0x20] sm:$0xff]
          %v580 = vld [vmem:[%s207 + $0x28] sm:$0xff]
          %v581 = vld [vmem:[%s207 + $0x30] sm:$0xff]
          %v582 = vld [vmem:[%s207 + $0x38] sm:$0xff]
          %v583 = vld [vmem:[%s207 + $0x40] sm:$0xff]
          %v584 = vld [vmem:[%s207 + $0x48] sm:$0xff]
          %v585 = vld [vmem:[%s207 + $0x50] sm:$0xff]
          %v586 = vld [vmem:[%s207 + $0x58] sm:$0xff]
          %v587 = vld [vmem:[%s207 + $0x60] sm:$0xff]
          %v588 = vld [vmem:[%s207 + $0x68] sm:$0xff]
          %v589 = vld [vmem:[%s207 + $0x70] sm:$0xff]
          %v590 = vld [vmem:[%s207 + $0x78] sm:$0xff]
          %v591 = vld [vmem:[%s207 + $0x80] sm:$0xff]
          %v592 = vld [vmem:[%s207 + $0x88] sm:$0xff]
          %v593 = vld [vmem:[%s207 + $0x90] sm:$0xff]
          %v594 = vld [vmem:[%s207 + $0x98] sm:$0xff]
          %v595 = vld [vmem:[%s207 + $0xa0] sm:$0xff]
          %v596 = vld [vmem:[%s207 + $0xa8] sm:$0xff]
          %v597 = vld [vmem:[%s207 + $0xb0] sm:$0xff]
          %v598 = vld [vmem:[%s207 + $0xb8] sm:$0xff]
          %v599 = vld [vmem:[%s207 + $0xc0] sm:$0xff]
          %v600 = vld [vmem:[%s207 + $0xc8] sm:$0xff]
          %v601 = vld [vmem:[%s207 + $0xd0] sm:$0xff]
          %v602 = vld [vmem:[%s207 + $0xd8] sm:$0xff]
          %v603 = vld [vmem:[%s207 + $0xe0] sm:$0xff]
          %v604 = vld [vmem:[%s207 + $0xe8] sm:$0xff]
          %v605 = vld [vmem:[%s207 + $0xf0] sm:$0xff]
          %v606 = vld [vmem:[%s207 + $0xf8] sm:$0xff]
          %v607 = vld [vmem:[#allocation8] sm:$0x1]
          %v608 = vperm.slane %v607, 0
          %v609 = vadd.f32 %v575, %v608
          %v610 = vadd.f32 %v576, %v608
          %v611 = vadd.f32 %v577, %v608
          %v612 = vadd.f32 %v578, %v608
          %v613 = vadd.f32 %v579, %v608
          %v614 = vadd.f32 %v580, %v608
          %v615 = vadd.f32 %v581, %v608
          %v616 = vadd.f32 %v582, %v608
          %v617 = vadd.f32 %v583, %v608
          %v618 = vadd.f32 %v584, %v608
          %v619 = vadd.f32 %v585, %v608
          %v620 = vadd.f32 %v586, %v608
          %v621 = vadd.f32 %v587, %v608
          %v622 = vadd.f32 %v588, %v608
          %v623 = vadd.f32 %v589, %v608
          %v624 = vadd.f32 %v590, %v608
          %v625 = vadd.f32 %v591, %v608
          %v626 = vadd.f32 %v592, %v608
          %v627 = vadd.f32 %v593, %v608
          %v628 = vadd.f32 %v594, %v608
          %v629 = vadd.f32 %v595, %v608
          %v630 = vadd.f32 %v596, %v608
          %v631 = vadd.f32 %v597, %v608
          %v632 = vadd.f32 %v598, %v608
          %v633 = vadd.f32 %v599, %v608
          %v634 = vadd.f32 %v600, %v608
          %v635 = vadd.f32 %v601, %v608
          %v636 = vadd.f32 %v602, %v608
          %v637 = vadd.f32 %v603, %v608
          %v638 = vadd.f32 %v604, %v608
          %v639 = vadd.f32 %v605, %v608
          %v640 = vadd.f32 %v606, %v608
          %v641 = vadd.f32 %v543, %v609
          %v642 = vadd.f32 %v544, %v610
          %v643 = vadd.f32 %v545, %v611
          %v644 = vadd.f32 %v546, %v612
          %v645 = vadd.f32 %v547, %v613
          %v646 = vadd.f32 %v548, %v614
          %v647 = vadd.f32 %v549, %v615
          %v648 = vadd.f32 %v550, %v616
          %v649 = vadd.f32 %v551, %v617
          %v650 = vadd.f32 %v552, %v618
          %v651 = vadd.f32 %v553, %v619
          %v652 = vadd.f32 %v554, %v620
          %v653 = vadd.f32 %v555, %v621
          %v654 = vadd.f32 %v556, %v622
          %v655 = vadd.f32 %v557, %v623
          %v656 = vadd.f32 %v558, %v624
          %v657 = vadd.f32 %v559, %v625
          %v658 = vadd.f32 %v560, %v626
          %v659 = vadd.f32 %v561, %v627
          %v660 = vadd.f32 %v562, %v628
          %v661 = vadd.f32 %v563, %v629
          %v662 = vadd.f32 %v564, %v630
          %v663 = vadd.f32 %v565, %v631
          %v664 = vadd.f32 %v566, %v632
          %v665 = vadd.f32 %v567, %v633
          %v666 = vadd.f32 %v568, %v634
          %v667 = vadd.f32 %v569, %v635
          %v668 = vadd.f32 %v570, %v636
          %v669 = vadd.f32 %v571, %v637
          %v670 = vadd.f32 %v572, %v638
          %v671 = vadd.f32 %v573, %v639
          %v672 = vadd.f32 %v574, %v640
          %673 = vst [vmem:[#allocation2] sm:$0xff] %v641
          %674 = vst [vmem:[#allocation2 + $0x8] sm:$0xff] %v642
          %675 = vst [vmem:[#allocation2 + $0x10] sm:$0xff] %v643
          %676 = vst [vmem:[#allocation2 + $0x18] sm:$0xff] %v644
          %677 = vst [vmem:[#allocation2 + $0x20] sm:$0xff] %v645
          %678 = vst [vmem:[#allocation2 + $0x28] sm:$0xff] %v646
          %679 = vst [vmem:[#allocation2 + $0x30] sm:$0xff] %v647
          %680 = vst [vmem:[#allocation2 + $0x38] sm:$0xff] %v648
          %681 = vst [vmem:[#allocation2 + $0x40] sm:$0xff] %v649
          %682 = vst [vmem:[#allocation2 + $0x48] sm:$0xff] %v650
          %683 = vst [vmem:[#allocation2 + $0x50] sm:$0xff] %v651
          %684 = vst [vmem:[#allocation2 + $0x58] sm:$0xff] %v652
          %685 = vst [vmem:[#allocation2 + $0x60] sm:$0xff] %v653
          %686 = vst [vmem:[#allocation2 + $0x68] sm:$0xff] %v654
          %687 = vst [vmem:[#allocation2 + $0x70] sm:$0xff] %v655
          %688 = vst [vmem:[#allocation2 + $0x78] sm:$0xff] %v656
          %689 = vst [vmem:[#allocation2 + $0x80] sm:$0xff] %v657
          %690 = vst [vmem:[#allocation2 + $0x88] sm:$0xff] %v658
          %691 = vst [vmem:[#allocation2 + $0x90] sm:$0xff] %v659
          %692 = vst [vmem:[#allocation2 + $0x98] sm:$0xff] %v660
          %693 = vst [vmem:[#allocation2 + $0xa0] sm:$0xff] %v661
          %694 = vst [vmem:[#allocation2 + $0xa8] sm:$0xff] %v662
          %695 = vst [vmem:[#allocation2 + $0xb0] sm:$0xff] %v663
          %696 = vst [vmem:[#allocation2 + $0xb8] sm:$0xff] %v664
          %697 = vst [vmem:[#allocation2 + $0xc0] sm:$0xff] %v665
          %698 = vst [vmem:[#allocation2 + $0xc8] sm:$0xff] %v666
          %699 = vst [vmem:[#allocation2 + $0xd0] sm:$0xff] %v667
          %700 = vst [vmem:[#allocation2 + $0xd8] sm:$0xff] %v668
          %701 = vst [vmem:[#allocation2 + $0xe0] sm:$0xff] %v669
          %702 = vst [vmem:[#allocation2 + $0xe8] sm:$0xff] %v670
          %703 = vst [vmem:[#allocation2 + $0xf0] sm:$0xff] %v671
          %704 = vst [vmem:[#allocation2 + $0xf8] sm:$0xff] %v672
          %v705 = vld [vmem:[#allocation2] sm:$0xff]
          %v706 = vld [vmem:[#allocation2 + $0x8] sm:$0xff]
          %v707 = vld [vmem:[#allocation2 + $0x10] sm:$0xff]
          %v708 = vld [vmem:[#allocation2 + $0x18] sm:$0xff]
          %v709 = vld [vmem:[#allocation2 + $0x20] sm:$0xff]
          %v710 = vld [vmem:[#allocation2 + $0x28] sm:$0xff]
          %v711 = vld [vmem:[#allocation2 + $0x30] sm:$0xff]
          %v712 = vld [vmem:[#allocation2 + $0x38] sm:$0xff]
          %v713 = vld [vmem:[#allocation2 + $0x40] sm:$0xff]
          %v714 = vld [vmem:[#allocation2 + $0x48] sm:$0xff]
          %v715 = vld [vmem:[#allocation2 + $0x50] sm:$0xff]
          %v716 = vld [vmem:[#allocation2 + $0x58] sm:$0xff]
          %v717 = vld [vmem:[#allocation2 + $0x60] sm:$0xff]
          %v718 = vld [vmem:[#allocation2 + $0x68] sm:$0xff]
          %v719 = vld [vmem:[#allocation2 + $0x70] sm:$0xff]
          %v720 = vld [vmem:[#allocation2 + $0x78] sm:$0xff]
          %v721 = vld [vmem:[#allocation2 + $0x80] sm:$0xff]
          %v722 = vld [vmem:[#allocation2 + $0x88] sm:$0xff]
          %v723 = vld [vmem:[#allocation2 + $0x90] sm:$0xff]
          %v724 = vld [vmem:[#allocation2 + $0x98] sm:$0xff]
          %v725 = vld [vmem:[#allocation2 + $0xa0] sm:$0xff]
          %v726 = vld [vmem:[#allocation2 + $0xa8] sm:$0xff]
          %v727 = vld [vmem:[#allocation2 + $0xb0] sm:$0xff]
          %v728 = vld [vmem:[#allocation2 + $0xb8] sm:$0xff]
          %v729 = vld [vmem:[#allocation2 + $0xc0] sm:$0xff]
          %v730 = vld [vmem:[#allocation2 + $0xc8] sm:$0xff]
          %v731 = vld [vmem:[#allocation2 + $0xd0] sm:$0xff]
          %v732 = vld [vmem:[#allocation2 + $0xd8] sm:$0xff]
          %v733 = vld [vmem:[#allocation2 + $0xe0] sm:$0xff]
          %v734 = vld [vmem:[#allocation2 + $0xe8] sm:$0xff]
          %v735 = vld [vmem:[#allocation2 + $0xf0] sm:$0xff]
          %v736 = vld [vmem:[#allocation2 + $0xf8] sm:$0xff]
          %737 = vadd.xlane.f32.xlu0 %v705
          %v738 = vpop.xlane.xlu0 %737
          %739 = vadd.xlane.f32.xlu0 %v706
          %v740 = vpop.xlane.xlu0 %739
          %741 = vadd.xlane.f32.xlu0 %v707
          %v742 = vpop.xlane.xlu0 %741
          %743 = vadd.xlane.f32.xlu0 %v708
          %v744 = vpop.xlane.xlu0 %743
          %745 = vadd.xlane.f32.xlu0 %v709
          %v746 = vpop.xlane.xlu0 %745
          %747 = vadd.xlane.f32.xlu0 %v710
          %v748 = vpop.xlane.xlu0 %747
          %749 = vadd.xlane.f32.xlu0 %v711
          %v750 = vpop.xlane.xlu0 %749
          %751 = vadd.xlane.f32.xlu0 %v712
          %v752 = vpop.xlane.xlu0 %751
          %753 = vadd.xlane.f32.xlu0 %v713
          %v754 = vpop.xlane.xlu0 %753
          %755 = vadd.xlane.f32.xlu0 %v714
          %v756 = vpop.xlane.xlu0 %755
          %757 = vadd.xlane.f32.xlu0 %v715
          %v758 = vpop.xlane.xlu0 %757
          %759 = vadd.xlane.f32.xlu0 %v716
          %v760 = vpop.xlane.xlu0 %759
          %761 = vadd.xlane.f32.xlu0 %v717
          %v762 = vpop.xlane.xlu0 %761
          %763 = vadd.xlane.f32.xlu0 %v718
          %v764 = vpop.xlane.xlu0 %763
          %765 = vadd.xlane.f32.xlu0 %v719
          %v766 = vpop.xlane.xlu0 %765
          %767 = vadd.xlane.f32.xlu0 %v720
          %v768 = vpop.xlane.xlu0 %767
          %769 = vadd.xlane.f32.xlu0 %v721
          %v770 = vpop.xlane.xlu0 %769
          %771 = vadd.xlane.f32.xlu0 %v722
          %v772 = vpop.xlane.xlu0 %771
          %773 = vadd.xlane.f32.xlu0 %v723
          %v774 = vpop.xlane.xlu0 %773
          %775 = vadd.xlane.f32.xlu0 %v724
          %v776 = vpop.xlane.xlu0 %775
          %777 = vadd.xlane.f32.xlu0 %v725
          %v778 = vpop.xlane.xlu0 %777
          %779 = vadd.xlane.f32.xlu0 %v726
          %v780 = vpop.xlane.xlu0 %779
          %781 = vadd.xlane.f32.xlu0 %v727
          %v782 = vpop.xlane.xlu0 %781
          %783 = vadd.xlane.f32.xlu0 %v728
          %v784 = vpop.xlane.xlu0 %783
          %785 = vadd.xlane.f32.xlu0 %v729
          %v786 = vpop.xlane.xlu0 %785
          %787 = vadd.xlane.f32.xlu0 %v730
          %v788 = vpop.xlane.xlu0 %787
          %789 = vadd.xlane.f32.xlu0 %v731
          %v790 = vpop.xlane.xlu0 %789
          %791 = vadd.xlane.f32.xlu0 %v732
          %v792 = vpop.xlane.xlu0 %791
          %793 = vadd.xlane.f32.xlu0 %v733
          %v794 = vpop.xlane.xlu0 %793
          %795 = vadd.xlane.f32.xlu0 %v734
          %v796 = vpop.xlane.xlu0 %795
          %797 = vadd.xlane.f32.xlu0 %v735
          %v798 = vpop.xlane.xlu0 %797
          %799 = vadd.xlane.f32.xlu0 %v736
          %v800 = vpop.xlane.xlu0 %799
          %v801 = vrcp.pop 128.0
          %v802 = vmul.f32 128.0, %v801
          %v803 = vsub.f32 1.0, %v802
          %v804 = vmul.f32 %v801, %v803
          %v805 = vadd.f32 %v801, %v804
          %vm806 = vweird.f32 %v801
          %v807 = vsel %vm806, %v801, %v805
          %v808 = vmul.f32 %v738, %v807
          %v809 = vmul.f32 %v740, %v807
          %v810 = vmul.f32 %v742, %v807
          %v811 = vmul.f32 %v744, %v807
          %v812 = vmul.f32 %v746, %v807
          %v813 = vmul.f32 %v748, %v807
          %v814 = vmul.f32 %v750, %v807
          %v815 = vmul.f32 %v752, %v807
          %v816 = vmul.f32 %v754, %v807
          %v817 = vmul.f32 %v756, %v807
          %v818 = vmul.f32 %v758, %v807
          %v819 = vmul.f32 %v760, %v807
          %v820 = vmul.f32 %v762, %v807
          %v821 = vmul.f32 %v764, %v807
          %v822 = vmul.f32 %v766, %v807
          %v823 = vmul.f32 %v768, %v807
          %v824 = vmul.f32 %v770, %v807
          %v825 = vmul.f32 %v772, %v807
          %v826 = vmul.f32 %v774, %v807
          %v827 = vmul.f32 %v776, %v807
          %v828 = vmul.f32 %v778, %v807
          %v829 = vmul.f32 %v780, %v807
          %v830 = vmul.f32 %v782, %v807
          %v831 = vmul.f32 %v784, %v807
          %v832 = vmul.f32 %v786, %v807
          %v833 = vmul.f32 %v788, %v807
          %v834 = vmul.f32 %v790, %v807
          %v835 = vmul.f32 %v792, %v807
          %v836 = vmul.f32 %v794, %v807
          %v837 = vmul.f32 %v796, %v807
          %v838 = vmul.f32 %v798, %v807
          %v839 = vmul.f32 %v800, %v807
          %v840 = vsub.f32 %v705, %v808
          %v841 = vsub.f32 %v706, %v809
          %v842 = vsub.f32 %v707, %v810
          %v843 = vsub.f32 %v708, %v811
          %v844 = vsub.f32 %v709, %v812
          %v845 = vsub.f32 %v710, %v813
          %v846 = vsub.f32 %v711, %v814
          %v847 = vsub.f32 %v712, %v815
          %v848 = vsub.f32 %v713, %v816
          %v849 = vsub.f32 %v714, %v817
          %v850 = vsub.f32 %v715, %v818
          %v851 = vsub.f32 %v716, %v819
          %v852 = vsub.f32 %v717, %v820
          %v853 = vsub.f32 %v718, %v821
          %v854 = vsub.f32 %v719, %v822
          %v855 = vsub.f32 %v720, %v823
          %v856 = vsub.f32 %v721, %v824
          %v857 = vsub.f32 %v722, %v825
          %v858 = vsub.f32 %v723, %v826
          %v859 = vsub.f32 %v724, %v827
          %v860 = vsub.f32 %v725, %v828
          %v861 = vsub.f32 %v726, %v829
          %v862 = vsub.f32 %v727, %v830
          %v863 = vsub.f32 %v728, %v831
          %v864 = vsub.f32 %v729, %v832
          %v865 = vsub.f32 %v730, %v833
          %v866 = vsub.f32 %v731, %v834
          %v867 = vsub.f32 %v732, %v835
          %v868 = vsub.f32 %v733, %v836
          %v869 = vsub.f32 %v734, %v837
          %v870 = vsub.f32 %v735, %v838
          %v871 = vsub.f32 %v736, %v839
          %v872 = vmul.f32 %v840, %v840
          %v873 = vmul.f32 %v841, %v841
          %v874 = vmul.f32 %v842, %v842
          %v875 = vmul.f32 %v843, %v843
          %v876 = vmul.f32 %v844, %v844
          %v877 = vmul.f32 %v845, %v845
          %v878 = vmul.f32 %v846, %v846
          %v879 = vmul.f32 %v847, %v847
          %v880 = vmul.f32 %v848, %v848
          %v881 = vmul.f32 %v849, %v849
          %v882 = vmul.f32 %v850, %v850
          %v883 = vmul.f32 %v851, %v851
          %v884 = vmul.f32 %v852, %v852
          %v885 = vmul.f32 %v853, %v853
          %v886 = vmul.f32 %v854, %v854
          %v887 = vmul.f32 %v855, %v855
          %v888 = vmul.f32 %v856, %v856
          %v889 = vmul.f32 %v857, %v857
          %v890 = vmul.f32 %v858, %v858
          %v891 = vmul.f32 %v859, %v859
          %v892 = vmul.f32 %v860, %v860
          %v893 = vmul.f32 %v861, %v861
          %v894 = vmul.f32 %v862, %v862
          %v895 = vmul.f32 %v863, %v863
          %v896 = vmul.f32 %v864, %v864
          %v897 = vmul.f32 %v865, %v865
          %v898 = vmul.f32 %v866, %v866
          %v899 = vmul.f32 %v867, %v867
          %v900 = vmul.f32 %v868, %v868
          %v901 = vmul.f32 %v869, %v869
          %v902 = vmul.f32 %v870, %v870
          %v903 = vmul.f32 %v871, %v871
          %904 = vadd.xlane.f32.xlu0 %v872
          %v905 = vpop.xlane.xlu0 %904
          %906 = vadd.xlane.f32.xlu0 %v873
          %v907 = vpop.xlane.xlu0 %906
          %908 = vadd.xlane.f32.xlu0 %v874
          %v909 = vpop.xlane.xlu0 %908
          %910 = vadd.xlane.f32.xlu0 %v875
          %v911 = vpop.xlane.xlu0 %910
          %912 = vadd.xlane.f32.xlu0 %v876
          %v913 = vpop.xlane.xlu0 %912
          %914 = vadd.xlane.f32.xlu0 %v877
          %v915 = vpop.xlane.xlu0 %914
          %916 = vadd.xlane.f32.xlu0 %v878
          %v917 = vpop.xlane.xlu0 %916
          %918 = vadd.xlane.f32.xlu0 %v879
          %v919 = vpop.xlane.xlu0 %918
          %920 = vadd.xlane.f32.xlu0 %v880
          %v921 = vpop.xlane.xlu0 %920
          %922 = vadd.xlane.f32.xlu0 %v881
          %v923 = vpop.xlane.xlu0 %922
          %924 = vadd.xlane.f32.xlu0 %v882
          %v925 = vpop.xlane.xlu0 %924
          %926 = vadd.xlane.f32.xlu0 %v883
          %v927 = vpop.xlane.xlu0 %926
          %928 = vadd.xlane.f32.xlu0 %v884
          %v929 = vpop.xlane.xlu0 %928
          %930 = vadd.xlane.f32.xlu0 %v885
          %v931 = vpop.xlane.xlu0 %930
          %932 = vadd.xlane.f32.xlu0 %v886
          %v933 = vpop.xlane.xlu0 %932
          %934 = vadd.xlane.f32.xlu0 %v887
          %v935 = vpop.xlane.xlu0 %934
          %936 = vadd.xlane.f32.xlu0 %v888
          %v937 = vpop.xlane.xlu0 %936
          %938 = vadd.xlane.f32.xlu0 %v889
          %v939 = vpop.xlane.xlu0 %938
          %940 = vadd.xlane.f32.xlu0 %v890
          %v941 = vpop.xlane.xlu0 %940
          %942 = vadd.xlane.f32.xlu0 %v891
          %v943 = vpop.xlane.xlu0 %942
          %944 = vadd.xlane.f32.xlu0 %v892
          %v945 = vpop.xlane.xlu0 %944
          %946 = vadd.xlane.f32.xlu0 %v893
          %v947 = vpop.xlane.xlu0 %946
          %948 = vadd.xlane.f32.xlu0 %v894
          %v949 = vpop.xlane.xlu0 %948
          %950 = vadd.xlane.f32.xlu0 %v895
          %v951 = vpop.xlane.xlu0 %950
          %952 = vadd.xlane.f32.xlu0 %v896
          %v953 = vpop.xlane.xlu0 %952
          %954 = vadd.xlane.f32.xlu0 %v897
          %v955 = vpop.xlane.xlu0 %954
          %956 = vadd.xlane.f32.xlu0 %v898
          %v957 = vpop.xlane.xlu0 %956
          %958 = vadd.xlane.f32.xlu0 %v899
          %v959 = vpop.xlane.xlu0 %958
          %960 = vadd.xlane.f32.xlu0 %v900
          %v961 = vpop.xlane.xlu0 %960
          %962 = vadd.xlane.f32.xlu0 %v901
          %v963 = vpop.xlane.xlu0 %962
          %964 = vadd.xlane.f32.xlu0 %v902
          %v965 = vpop.xlane.xlu0 %964
          %966 = vadd.xlane.f32.xlu0 %v903
          %v967 = vpop.xlane.xlu0 %966
          %v968 = vmul.f32 %v905, %v807
          %v969 = vmul.f32 %v907, %v807
          %v970 = vmul.f32 %v909, %v807
          %v971 = vmul.f32 %v911, %v807
          %v972 = vmul.f32 %v913, %v807
          %v973 = vmul.f32 %v915, %v807
          %v974 = vmul.f32 %v917, %v807
          %v975 = vmul.f32 %v919, %v807
          %v976 = vmul.f32 %v921, %v807
          %v977 = vmul.f32 %v923, %v807
          %v978 = vmul.f32 %v925, %v807
          %v979 = vmul.f32 %v927, %v807
          %v980 = vmul.f32 %v929, %v807
          %v981 = vmul.f32 %v931, %v807
          %v982 = vmul.f32 %v933, %v807
          %v983 = vmul.f32 %v935, %v807
          %v984 = vmul.f32 %v937, %v807
          %v985 = vmul.f32 %v939, %v807
          %v986 = vmul.f32 %v941, %v807
          %v987 = vmul.f32 %v943, %v807
          %v988 = vmul.f32 %v945, %v807
          %v989 = vmul.f32 %v947, %v807
          %v990 = vmul.f32 %v949, %v807
          %v991 = vmul.f32 %v951, %v807
          %v992 = vmul.f32 %v953, %v807
          %v993 = vmul.f32 %v955, %v807
          %v994 = vmul.f32 %v957, %v807
          %v995 = vmul.f32 %v959, %v807
          %v996 = vmul.f32 %v961, %v807
          %v997 = vmul.f32 %v963, %v807
          %v998 = vmul.f32 %v965, %v807
          %v999 = vmul.f32 %v967, %v807
          %v1000 = vadd.f32 %v968, 1e-05
          %v1001 = vadd.f32 %v969, 1e-05
          %v1002 = vadd.f32 %v970, 1e-05
          %v1003 = vadd.f32 %v971, 1e-05
          %v1004 = vadd.f32 %v972, 1e-05
          %v1005 = vadd.f32 %v973, 1e-05
          %v1006 = vadd.f32 %v974, 1e-05
          %v1007 = vadd.f32 %v975, 1e-05
          %v1008 = vadd.f32 %v976, 1e-05
          %v1009 = vadd.f32 %v977, 1e-05
          %v1010 = vadd.f32 %v978, 1e-05
          %v1011 = vadd.f32 %v979, 1e-05
          %v1012 = vadd.f32 %v980, 1e-05
          %v1013 = vadd.f32 %v981, 1e-05
          %v1014 = vadd.f32 %v982, 1e-05
          %v1015 = vadd.f32 %v983, 1e-05
          %v1016 = vadd.f32 %v984, 1e-05
          %v1017 = vadd.f32 %v985, 1e-05
          %v1018 = vadd.f32 %v986, 1e-05
          %v1019 = vadd.f32 %v987, 1e-05
          %v1020 = vadd.f32 %v988, 1e-05
          %v1021 = vadd.f32 %v989, 1e-05
          %v1022 = vadd.f32 %v990, 1e-05
          %v1023 = vadd.f32 %v991, 1e-05
          %v1024 = vadd.f32 %v992, 1e-05
          %v1025 = vadd.f32 %v993, 1e-05
          %v1026 = vadd.f32 %v994, 1e-05
          %v1027 = vadd.f32 %v995, 1e-05
          %v1028 = vadd.f32 %v996, 1e-05
          %v1029 = vadd.f32 %v997, 1e-05
          %v1030 = vadd.f32 %v998, 1e-05
          %v1031 = vadd.f32 %v999, 1e-05
          %v1032 = vrsqrt.pop %v1000
          %v1033 = vmul.f32 %v1032, %v1000
          %v1034 = vmul.f32 %v1033, %v1032
          %v1035 = vmul.f32 0.5, %v1034
          %v1036 = vsub.f32 1.5, %v1035
          %v1037 = vmul.f32 %v1032, %v1036
          %vm1038 = vweird.f32 %v1000
          %vm1039 = vweird.f32 %v1032
          %vm1040 = vmor %vm1038, %vm1039
          %v1041 = vsel %vm1040, %v1032, %v1037
          %v1042 = vrsqrt.pop %v1001
          %v1043 = vmul.f32 %v1042, %v1001
          %v1044 = vmul.f32 %v1043, %v1042
          %v1045 = vmul.f32 0.5, %v1044
          %v1046 = vsub.f32 1.5, %v1045
          %v1047 = vmul.f32 %v1042, %v1046
          %vm1048 = vweird.f32 %v1001
          %vm1049 = vweird.f32 %v1042
          %vm1050 = vmor %vm1048, %vm1049
          %v1051 = vsel %vm1050, %v1042, %v1047
          %v1052 = vrsqrt.pop %v1002
          %v1053 = vmul.f32 %v1052, %v1002
          %v1054 = vmul.f32 %v1053, %v1052
          %v1055 = vmul.f32 0.5, %v1054
          %v1056 = vsub.f32 1.5, %v1055
          %v1057 = vmul.f32 %v1052, %v1056
          %vm1058 = vweird.f32 %v1002
          %vm1059 = vweird.f32 %v1052
          %vm1060 = vmor %vm1058, %vm1059
          %v1061 = vsel %vm1060, %v1052, %v1057
          %v1062 = vrsqrt.pop %v1003
          %v1063 = vmul.f32 %v1062, %v1003
          %v1064 = vmul.f32 %v1063, %v1062
          %v1065 = vmul.f32 0.5, %v1064
          %v1066 = vsub.f32 1.5, %v1065
          %v1067 = vmul.f32 %v1062, %v1066
          %vm1068 = vweird.f32 %v1003
          %vm1069 = vweird.f32 %v1062
          %vm1070 = vmor %vm1068, %vm1069
          %v1071 = vsel %vm1070, %v1062, %v1067
          %v1072 = vrsqrt.pop %v1004
          %v1073 = vmul.f32 %v1072, %v1004
          %v1074 = vmul.f32 %v1073, %v1072
          %v1075 = vmul.f32 0.5, %v1074
          %v1076 = vsub.f32 1.5, %v1075
          %v1077 = vmul.f32 %v1072, %v1076
          %vm1078 = vweird.f32 %v1004
          %vm1079 = vweird.f32 %v1072
          %vm1080 = vmor %vm1078, %vm1079
          %v1081 = vsel %vm1080, %v1072, %v1077
          %v1082 = vrsqrt.pop %v1005
          %v1083 = vmul.f32 %v1082, %v1005
          %v1084 = vmul.f32 %v1083, %v1082
          %v1085 = vmul.f32 0.5, %v1084
          %v1086 = vsub.f32 1.5, %v1085
          %v1087 = vmul.f32 %v1082, %v1086
          %vm1088 = vweird.f32 %v1005
          %vm1089 = vweird.f32 %v1082
          %vm1090 = vmor %vm1088, %vm1089
          %v1091 = vsel %vm1090, %v1082, %v1087
          %v1092 = vrsqrt.pop %v1006
          %v1093 = vmul.f32 %v1092, %v1006
          %v1094 = vmul.f32 %v1093, %v1092
          %v1095 = vmul.f32 0.5, %v1094
          %v1096 = vsub.f32 1.5, %v1095
          %v1097 = vmul.f32 %v1092, %v1096
          %vm1098 = vweird.f32 %v1006
          %vm1099 = vweird.f32 %v1092
          %vm1100 = vmor %vm1098, %vm1099
          %v1101 = vsel %vm1100, %v1092, %v1097
          %v1102 = vrsqrt.pop %v1007
          %v1103 = vmul.f32 %v1102, %v1007
          %v1104 = vmul.f32 %v1103, %v1102
          %v1105 = vmul.f32 0.5, %v1104
          %v1106 = vsub.f32 1.5, %v1105
          %v1107 = vmul.f32 %v1102, %v1106
          %vm1108 = vweird.f32 %v1007
          %vm1109 = vweird.f32 %v1102
          %vm1110 = vmor %vm1108, %vm1109
          %v1111 = vsel %vm1110, %v1102, %v1107
          %v1112 = vrsqrt.pop %v1008
          %v1113 = vmul.f32 %v1112, %v1008
          %v1114 = vmul.f32 %v1113, %v1112
          %v1115 = vmul.f32 0.5, %v1114
          %v1116 = vsub.f32 1.5, %v1115
          %v1117 = vmul.f32 %v1112, %v1116
          %vm1118 = vweird.f32 %v1008
          %vm1119 = vweird.f32 %v1112
          %vm1120 = vmor %vm1118, %vm1119
          %v1121 = vsel %vm1120, %v1112, %v1117
          %v1122 = vrsqrt.pop %v1009
          %v1123 = vmul.f32 %v1122, %v1009
          %v1124 = vmul.f32 %v1123, %v1122
          %v1125 = vmul.f32 0.5, %v1124
          %v1126 = vsub.f32 1.5, %v1125
          %v1127 = vmul.f32 %v1122, %v1126
          %vm1128 = vweird.f32 %v1009
          %vm1129 = vweird.f32 %v1122
          %vm1130 = vmor %vm1128, %vm1129
          %v1131 = vsel %vm1130, %v1122, %v1127
          %v1132 = vrsqrt.pop %v1010
          %v1133 = vmul.f32 %v1132, %v1010
          %v1134 = vmul.f32 %v1133, %v1132
          %v1135 = vmul.f32 0.5, %v1134
          %v1136 = vsub.f32 1.5, %v1135
          %v1137 = vmul.f32 %v1132, %v1136
          %vm1138 = vweird.f32 %v1010
          %vm1139 = vweird.f32 %v1132
          %vm1140 = vmor %vm1138, %vm1139
          %v1141 = vsel %vm1140, %v1132, %v1137
          %v1142 = vrsqrt.pop %v1011
          %v1143 = vmul.f32 %v1142, %v1011
          %v1144 = vmul.f32 %v1143, %v1142
          %v1145 = vmul.f32 0.5, %v1144
          %v1146 = vsub.f32 1.5, %v1145
          %v1147 = vmul.f32 %v1142, %v1146
          %vm1148 = vweird.f32 %v1011
          %vm1149 = vweird.f32 %v1142
          %vm1150 = vmor %vm1148, %vm1149
          %v1151 = vsel %vm1150, %v1142, %v1147
          %v1152 = vrsqrt.pop %v1012
          %v1153 = vmul.f32 %v1152, %v1012
          %v1154 = vmul.f32 %v1153, %v1152
          %v1155 = vmul.f32 0.5, %v1154
          %v1156 = vsub.f32 1.5, %v1155
          %v1157 = vmul.f32 %v1152, %v1156
          %vm1158 = vweird.f32 %v1012
          %vm1159 = vweird.f32 %v1152
          %vm1160 = vmor %vm1158, %vm1159
          %v1161 = vsel %vm1160, %v1152, %v1157
          %v1162 = vrsqrt.pop %v1013
          %v1163 = vmul.f32 %v1162, %v1013
          %v1164 = vmul.f32 %v1163, %v1162
          %v1165 = vmul.f32 0.5, %v1164
          %v1166 = vsub.f32 1.5, %v1165
          %v1167 = vmul.f32 %v1162, %v1166
          %vm1168 = vweird.f32 %v1013
          %vm1169 = vweird.f32 %v1162
          %vm1170 = vmor %vm1168, %vm1169
          %v1171 = vsel %vm1170, %v1162, %v1167
          %v1172 = vrsqrt.pop %v1014
          %v1173 = vmul.f32 %v1172, %v1014
          %v1174 = vmul.f32 %v1173, %v1172
          %v1175 = vmul.f32 0.5, %v1174
          %v1176 = vsub.f32 1.5, %v1175
          %v1177 = vmul.f32 %v1172, %v1176
          %vm1178 = vweird.f32 %v1014
          %vm1179 = vweird.f32 %v1172
          %vm1180 = vmor %vm1178, %vm1179
          %v1181 = vsel %vm1180, %v1172, %v1177
          %v1182 = vrsqrt.pop %v1015
          %v1183 = vmul.f32 %v1182, %v1015
          %v1184 = vmul.f32 %v1183, %v1182
          %v1185 = vmul.f32 0.5, %v1184
          %v1186 = vsub.f32 1.5, %v1185
          %v1187 = vmul.f32 %v1182, %v1186
          %vm1188 = vweird.f32 %v1015
          %vm1189 = vweird.f32 %v1182
          %vm1190 = vmor %vm1188, %vm1189
          %v1191 = vsel %vm1190, %v1182, %v1187
          %v1192 = vrsqrt.pop %v1016
          %v1193 = vmul.f32 %v1192, %v1016
          %v1194 = vmul.f32 %v1193, %v1192
          %v1195 = vmul.f32 0.5, %v1194
          %v1196 = vsub.f32 1.5, %v1195
          %v1197 = vmul.f32 %v1192, %v1196
          %vm1198 = vweird.f32 %v1016
          %vm1199 = vweird.f32 %v1192
          %vm1200 = vmor %vm1198, %vm1199
          %v1201 = vsel %vm1200, %v1192, %v1197
          %v1202 = vrsqrt.pop %v1017
          %v1203 = vmul.f32 %v1202, %v1017
          %v1204 = vmul.f32 %v1203, %v1202
          %v1205 = vmul.f32 0.5, %v1204
          %v1206 = vsub.f32 1.5, %v1205
          %v1207 = vmul.f32 %v1202, %v1206
          %vm1208 = vweird.f32 %v1017
          %vm1209 = vweird.f32 %v1202
          %vm1210 = vmor %vm1208, %vm1209
          %v1211 = vsel %vm1210, %v1202, %v1207
          %v1212 = vrsqrt.pop %v1018
          %v1213 = vmul.f32 %v1212, %v1018
          %v1214 = vmul.f32 %v1213, %v1212
          %v1215 = vmul.f32 0.5, %v1214
          %v1216 = vsub.f32 1.5, %v1215
          %v1217 = vmul.f32 %v1212, %v1216
          %vm1218 = vweird.f32 %v1018
          %vm1219 = vweird.f32 %v1212
          %vm1220 = vmor %vm1218, %vm1219
          %v1221 = vsel %vm1220, %v1212, %v1217
          %v1222 = vrsqrt.pop %v1019
          %v1223 = vmul.f32 %v1222, %v1019
          %v1224 = vmul.f32 %v1223, %v1222
          %v1225 = vmul.f32 0.5, %v1224
          %v1226 = vsub.f32 1.5, %v1225
          %v1227 = vmul.f32 %v1222, %v1226
          %vm1228 = vweird.f32 %v1019
          %vm1229 = vweird.f32 %v1222
          %vm1230 = vmor %vm1228, %vm1229
          %v1231 = vsel %vm1230, %v1222, %v1227
          %v1232 = vrsqrt.pop %v1020
          %v1233 = vmul.f32 %v1232, %v1020
          %v1234 = vmul.f32 %v1233, %v1232
          %v1235 = vmul.f32 0.5, %v1234
          %v1236 = vsub.f32 1.5, %v1235
          %v1237 = vmul.f32 %v1232, %v1236
          %vm1238 = vweird.f32 %v1020
          %vm1239 = vweird.f32 %v1232
          %vm1240 = vmor %vm1238, %vm1239
          %v1241 = vsel %vm1240, %v1232, %v1237
          %v1242 = vrsqrt.pop %v1021
          %v1243 = vmul.f32 %v1242, %v1021
          %v1244 = vmul.f32 %v1243, %v1242
          %v1245 = vmul.f32 0.5, %v1244
          %v1246 = vsub.f32 1.5, %v1245
          %v1247 = vmul.f32 %v1242, %v1246
          %vm1248 = vweird.f32 %v1021
          %vm1249 = vweird.f32 %v1242
          %vm1250 = vmor %vm1248, %vm1249
          %v1251 = vsel %vm1250, %v1242, %v1247
          %v1252 = vrsqrt.pop %v1022
          %v1253 = vmul.f32 %v1252, %v1022
          %v1254 = vmul.f32 %v1253, %v1252
          %v1255 = vmul.f32 0.5, %v1254
          %v1256 = vsub.f32 1.5, %v1255
          %v1257 = vmul.f32 %v1252, %v1256
          %vm1258 = vweird.f32 %v1022
          %vm1259 = vweird.f32 %v1252
          %vm1260 = vmor %vm1258, %vm1259
          %v1261 = vsel %vm1260, %v1252, %v1257
          %v1262 = vrsqrt.pop %v1023
          %v1263 = vmul.f32 %v1262, %v1023
          %v1264 = vmul.f32 %v1263, %v1262
          %v1265 = vmul.f32 0.5, %v1264
          %v1266 = vsub.f32 1.5, %v1265
          %v1267 = vmul.f32 %v1262, %v1266
          %vm1268 = vweird.f32 %v1023
          %vm1269 = vweird.f32 %v1262
          %vm1270 = vmor %vm1268, %vm1269
          %v1271 = vsel %vm1270, %v1262, %v1267
          %v1272 = vrsqrt.pop %v1024
          %v1273 = vmul.f32 %v1272, %v1024
          %v1274 = vmul.f32 %v1273, %v1272
          %v1275 = vmul.f32 0.5, %v1274
          %v1276 = vsub.f32 1.5, %v1275
          %v1277 = vmul.f32 %v1272, %v1276
          %vm1278 = vweird.f32 %v1024
          %vm1279 = vweird.f32 %v1272
          %vm1280 = vmor %vm1278, %vm1279
          %v1281 = vsel %vm1280, %v1272, %v1277
          %v1282 = vrsqrt.pop %v1025
          %v1283 = vmul.f32 %v1282, %v1025
          %v1284 = vmul.f32 %v1283, %v1282
          %v1285 = vmul.f32 0.5, %v1284
          %v1286 = vsub.f32 1.5, %v1285
          %v1287 = vmul.f32 %v1282, %v1286
          %vm1288 = vweird.f32 %v1025
          %vm1289 = vweird.f32 %v1282
          %vm1290 = vmor %vm1288, %vm1289
          %v1291 = vsel %vm1290, %v1282, %v1287
          %v1292 = vrsqrt.pop %v1026
          %v1293 = vmul.f32 %v1292, %v1026
          %v1294 = vmul.f32 %v1293, %v1292
          %v1295 = vmul.f32 0.5, %v1294
          %v1296 = vsub.f32 1.5, %v1295
          %v1297 = vmul.f32 %v1292, %v1296
          %vm1298 = vweird.f32 %v1026
          %vm1299 = vweird.f32 %v1292
          %vm1300 = vmor %vm1298, %vm1299
          %v1301 = vsel %vm1300, %v1292, %v1297
          %v1302 = vrsqrt.pop %v1027
          %v1303 = vmul.f32 %v1302, %v1027
          %v1304 = vmul.f32 %v1303, %v1302
          %v1305 = vmul.f32 0.5, %v1304
          %v1306 = vsub.f32 1.5, %v1305
          %v1307 = vmul.f32 %v1302, %v1306
          %vm1308 = vweird.f32 %v1027
          %vm1309 = vweird.f32 %v1302
          %vm1310 = vmor %vm1308, %vm1309
          %v1311 = vsel %vm1310, %v1302, %v1307
          %v1312 = vrsqrt.pop %v1028
          %v1313 = vmul.f32 %v1312, %v1028
          %v1314 = vmul.f32 %v1313, %v1312
          %v1315 = vmul.f32 0.5, %v1314
          %v1316 = vsub.f32 1.5, %v1315
          %v1317 = vmul.f32 %v1312, %v1316
          %vm1318 = vweird.f32 %v1028
          %vm1319 = vweird.f32 %v1312
          %vm1320 = vmor %vm1318, %vm1319
          %v1321 = vsel %vm1320, %v1312, %v1317
          %v1322 = vrsqrt.pop %v1029
          %v1323 = vmul.f32 %v1322, %v1029
          %v1324 = vmul.f32 %v1323, %v1322
          %v1325 = vmul.f32 0.5, %v1324
          %v1326 = vsub.f32 1.5, %v1325
          %v1327 = vmul.f32 %v1322, %v1326
          %vm1328 = vweird.f32 %v1029
          %vm1329 = vweird.f32 %v1322
          %vm1330 = vmor %vm1328, %vm1329
          %v1331 = vsel %vm1330, %v1322, %v1327
          %v1332 = vrsqrt.pop %v1030
          %v1333 = vmul.f32 %v1332, %v1030
          %v1334 = vmul.f32 %v1333, %v1332
          %v1335 = vmul.f32 0.5, %v1334
          %v1336 = vsub.f32 1.5, %v1335
          %v1337 = vmul.f32 %v1332, %v1336
          %vm1338 = vweird.f32 %v1030
          %vm1339 = vweird.f32 %v1332
          %vm1340 = vmor %vm1338, %vm1339
          %v1341 = vsel %vm1340, %v1332, %v1337
          %v1342 = vrsqrt.pop %v1031
          %v1343 = vmul.f32 %v1342, %v1031
          %v1344 = vmul.f32 %v1343, %v1342
          %v1345 = vmul.f32 0.5, %v1344
          %v1346 = vsub.f32 1.5, %v1345
          %v1347 = vmul.f32 %v1342, %v1346
          %vm1348 = vweird.f32 %v1031
          %vm1349 = vweird.f32 %v1342
          %vm1350 = vmor %vm1348, %vm1349
          %v1351 = vsel %vm1350, %v1342, %v1347
          %v1352 = vld [vmem:[#allocation8 + $0x1] sm:$0x1]
          %v1353 = vperm.slane %v1352, 0
          %v1354 = vmul.f32 %v1041, %v1353
          %v1355 = vmul.f32 %v1051, %v1353
          %v1356 = vmul.f32 %v1061, %v1353
          %v1357 = vmul.f32 %v1071, %v1353
          %v1358 = vmul.f32 %v1081, %v1353
          %v1359 = vmul.f32 %v1091, %v1353
          %v1360 = vmul.f32 %v1101, %v1353
          %v1361 = vmul.f32 %v1111, %v1353
          %v1362 = vmul.f32 %v1121, %v1353
          %v1363 = vmul.f32 %v1131, %v1353
          %v1364 = vmul.f32 %v1141, %v1353
          %v1365 = vmul.f32 %v1151, %v1353
          %v1366 = vmul.f32 %v1161, %v1353
          %v1367 = vmul.f32 %v1171, %v1353
          %v1368 = vmul.f32 %v1181, %v1353
          %v1369 = vmul.f32 %v1191, %v1353
          %v1370 = vmul.f32 %v1201, %v1353
          %v1371 = vmul.f32 %v1211, %v1353
          %v1372 = vmul.f32 %v1221, %v1353
          %v1373 = vmul.f32 %v1231, %v1353
          %v1374 = vmul.f32 %v1241, %v1353
          %v1375 = vmul.f32 %v1251, %v1353
          %v1376 = vmul.f32 %v1261, %v1353
          %v1377 = vmul.f32 %v1271, %v1353
          %v1378 = vmul.f32 %v1281, %v1353
          %v1379 = vmul.f32 %v1291, %v1353
          %v1380 = vmul.f32 %v1301, %v1353
          %v1381 = vmul.f32 %v1311, %v1353
          %v1382 = vmul.f32 %v1321, %v1353
          %v1383 = vmul.f32 %v1331, %v1353
          %v1384 = vmul.f32 %v1341, %v1353
          %v1385 = vmul.f32 %v1351, %v1353
          %v1386 = vmul.f32 %v840, %v1354
          %v1387 = vmul.f32 %v841, %v1355
          %v1388 = vmul.f32 %v842, %v1356
          %v1389 = vmul.f32 %v843, %v1357
          %v1390 = vmul.f32 %v844, %v1358
          %v1391 = vmul.f32 %v845, %v1359
          %v1392 = vmul.f32 %v846, %v1360
          %v1393 = vmul.f32 %v847, %v1361
          %v1394 = vmul.f32 %v848, %v1362
          %v1395 = vmul.f32 %v849, %v1363
          %v1396 = vmul.f32 %v850, %v1364
          %v1397 = vmul.f32 %v851, %v1365
          %v1398 = vmul.f32 %v852, %v1366
          %v1399 = vmul.f32 %v853, %v1367
          %v1400 = vmul.f32 %v854, %v1368
          %v1401 = vmul.f32 %v855, %v1369
          %v1402 = vmul.f32 %v856, %v1370
          %v1403 = vmul.f32 %v857, %v1371
          %v1404 = vmul.f32 %v858, %v1372
          %v1405 = vmul.f32 %v859, %v1373
          %v1406 = vmul.f32 %v860, %v1374
          %v1407 = vmul.f32 %v861, %v1375
          %v1408 = vmul.f32 %v862, %v1376
          %v1409 = vmul.f32 %v863, %v1377
          %v1410 = vmul.f32 %v864, %v1378
          %v1411 = vmul.f32 %v865, %v1379
          %v1412 = vmul.f32 %v866, %v1380
          %v1413 = vmul.f32 %v867, %v1381
          %v1414 = vmul.f32 %v868, %v1382
          %v1415 = vmul.f32 %v869, %v1383
          %v1416 = vmul.f32 %v870, %v1384
          %v1417 = vmul.f32 %v871, %v1385
          %v1418 = vld [vmem:[#allocation8 + $0x2] sm:$0x1]
          %v1419 = vperm.slane %v1418, 0
          %v1420 = vadd.f32 %v1386, %v1419
          %v1421 = vadd.f32 %v1387, %v1419
          %v1422 = vadd.f32 %v1388, %v1419
          %v1423 = vadd.f32 %v1389, %v1419
          %v1424 = vadd.f32 %v1390, %v1419
          %v1425 = vadd.f32 %v1391, %v1419
          %v1426 = vadd.f32 %v1392, %v1419
          %v1427 = vadd.f32 %v1393, %v1419
          %v1428 = vadd.f32 %v1394, %v1419
          %v1429 = vadd.f32 %v1395, %v1419
          %v1430 = vadd.f32 %v1396, %v1419
          %v1431 = vadd.f32 %v1397, %v1419
          %v1432 = vadd.f32 %v1398, %v1419
          %v1433 = vadd.f32 %v1399, %v1419
          %v1434 = vadd.f32 %v1400, %v1419
          %v1435 = vadd.f32 %v1401, %v1419
          %v1436 = vadd.f32 %v1402, %v1419
          %v1437 = vadd.f32 %v1403, %v1419
          %v1438 = vadd.f32 %v1404, %v1419
          %v1439 = vadd.f32 %v1405, %v1419
          %v1440 = vadd.f32 %v1406, %v1419
          %v1441 = vadd.f32 %v1407, %v1419
          %v1442 = vadd.f32 %v1408, %v1419
          %v1443 = vadd.f32 %v1409, %v1419
          %v1444 = vadd.f32 %v1410, %v1419
          %v1445 = vadd.f32 %v1411, %v1419
          %v1446 = vadd.f32 %v1412, %v1419
          %v1447 = vadd.f32 %v1413, %v1419
          %v1448 = vadd.f32 %v1414, %v1419
          %v1449 = vadd.f32 %v1415, %v1419
          %v1450 = vadd.f32 %v1416, %v1419
          %v1451 = vadd.f32 %v1417, %v1419
          %1452 = vst [vmem:[%s240] sm:$0xff] %v1420
          %1453 = vst [vmem:[%s240 + $0x8] sm:$0xff] %v1421
          %1454 = vst [vmem:[%s240 + $0x10] sm:$0xff] %v1422
          %1455 = vst [vmem:[%s240 + $0x18] sm:$0xff] %v1423
          %1456 = vst [vmem:[%s240 + $0x20] sm:$0xff] %v1424
          %1457 = vst [vmem:[%s240 + $0x28] sm:$0xff] %v1425
          %1458 = vst [vmem:[%s240 + $0x30] sm:$0xff] %v1426
          %1459 = vst [vmem:[%s240 + $0x38] sm:$0xff] %v1427
          %1460 = vst [vmem:[%s240 + $0x40] sm:$0xff] %v1428
          %1461 = vst [vmem:[%s240 + $0x48] sm:$0xff] %v1429
          %1462 = vst [vmem:[%s240 + $0x50] sm:$0xff] %v1430
          %1463 = vst [vmem:[%s240 + $0x58] sm:$0xff] %v1431
          %1464 = vst [vmem:[%s240 + $0x60] sm:$0xff] %v1432
          %1465 = vst [vmem:[%s240 + $0x68] sm:$0xff] %v1433
          %1466 = vst [vmem:[%s240 + $0x70] sm:$0xff] %v1434
          %1467 = vst [vmem:[%s240 + $0x78] sm:$0xff] %v1435
          %1468 = vst [vmem:[%s240 + $0x80] sm:$0xff] %v1436
          %1469 = vst [vmem:[%s240 + $0x88] sm:$0xff] %v1437
          %1470 = vst [vmem:[%s240 + $0x90] sm:$0xff] %v1438
          %1471 = vst [vmem:[%s240 + $0x98] sm:$0xff] %v1439
          %1472 = vst [vmem:[%s240 + $0xa0] sm:$0xff] %v1440
          %1473 = vst [vmem:[%s240 + $0xa8] sm:$0xff] %v1441
          %1474 = vst [vmem:[%s240 + $0xb0] sm:$0xff] %v1442
          %1475 = vst [vmem:[%s240 + $0xb8] sm:$0xff] %v1443
          %1476 = vst [vmem:[%s240 + $0xc0] sm:$0xff] %v1444
          %1477 = vst [vmem:[%s240 + $0xc8] sm:$0xff] %v1445
          %1478 = vst [vmem:[%s240 + $0xd0] sm:$0xff] %v1446
          %1479 = vst [vmem:[%s240 + $0xd8] sm:$0xff] %v1447
          %1480 = vst [vmem:[%s240 + $0xe0] sm:$0xff] %v1448
          %1481 = vst [vmem:[%s240 + $0xe8] sm:$0xff] %v1449
          %1482 = vst [vmem:[%s240 + $0xf0] sm:$0xff] %v1450
          %1483 = vst [vmem:[%s240 + $0xf8] sm:$0xff] %v1451
        $region52: #{tpu_custom_call.1} parent=31 // pred_fallthru
          _
        %s1484 = sand.u32 %s114, 1
        %s1485 = scalar_lea.sflag [#allocation5], %s1484
        %s1486 = sand.u32 %s114, 1
        %s1487 = smul.addr %s1486, 256
        %s1488 = scalar_lea.vmem [#allocation9], %s1487
        // Predicated region
        $region53: #{tpu_custom_call.1} parent=31 // pred_check
          %p1489 = pneg %p124
        $region54: #{tpu_custom_call.1} parent=31 // pred_check_branch
          %1491 = sbr.rel (%p1489) target = $region56
        $region55: #{tpu_custom_call.1} parent=31 // pred_region
          %s1492 = smul.u32 32, %s25
          %1494 = vsyncadd %s1485, 0
          %s1495 = smul.addr %s1492, 8
          %s1496 = scalar_lea.hbm %s3, %s1495
          %s1497 = sshll.u32 %s1488, 4
          %s1498 = int_to_ptr.vmem [resolvable:$true] %s1497
          %s1499 = sshll.u32 %s1496, 4
          %s1500 = int_to_ptr.hbm [resolvable:$true] %s1499
          %1505 = dma.vmem_to_hbm [thread:$0]  %s1498, 4096, %s1500, %s1485, 128, 128, 8
        $region56: #{tpu_custom_call.1} parent=31 // pred_fallthru
          _
      $region32: #{tpu_custom_call.1} parent=5 // pred_fallthru
        _
      %p1506 = scmp.le.s32.totalorder 2, %s16
      // Predicated region
      $region57: #{tpu_custom_call.1} parent=5 // pred_check
        %p1507 = pneg %p1506
      $region58: #{tpu_custom_call.1} parent=5 // pred_check_branch
        %1509 = sbr.rel (%p1507) target = $region60
      $region59: #{tpu_custom_call.1} parent=5 // pred_region
        %s1510 = ssub.s32 %s16, 2
        // Predicated region
        $region61: #{tpu_custom_call.1} parent=59 // pred_check
          %p1511 = pneg %p130
        $region62: #{tpu_custom_call.1} parent=59 // pred_check_branch
          %1513 = sbr.rel (%p1511) target = $region64
        $region63: #{tpu_custom_call.1} parent=59 // pred_region
          %s1514 = sand.u32 %s115, 1
          %s1515 = scalar_lea.sflag [#allocation5], %s1514
          %s1516 = sand.u32 %s115, 1
          %s1517 = smul.addr %s1516, 256
          %s1518 = scalar_lea.vmem [#allocation9], %s1517
          %1520 = dma.done %s1515, 4096
        $region64: #{tpu_custom_call.1} parent=59 // pred_fallthru
          _
      $region60: #{tpu_custom_call.1} parent=5 // pred_fallthru
        _
    $region6: #{tpu_custom_call.1} parent=1 // loop_footer
      %s20 = sadd.s32 1, %s16
    $region7: #{tpu_custom_call.1} parent=1 // loop_footer_branch
      %15 = sbr.rel target = $region3
    $region8: #{tpu_custom_call.1} parent=1 // loop_exit
      _
    %1521 = vsyncpa [#allocation4], 1
    %s1522 = scalar_lea.sflag [#allocation4], 1
    %1523 = vsyncpa %s1522, 1
    %1524 = vsyncpa [#allocation7], 1
    %1525 = vsyncpa [#allocation5], 1
    %s1526 = scalar_lea.sflag [#allocation5], 1
    %1527 = vsyncpa %s1526, 1

</llo_original>
